<compile_context>
chip_gen: v5e
topology: v5e:2x2
jax: 0.10.0
libtpu: 0.0.40
codegen_flags: <defaults>
</compile_context>

<pallas_src>
import functools

import jax
import jax.numpy as jnp
from jax.experimental import pallas as pl
from jax.experimental.pallas import tpu as pltpu


C_PAD = 128  # lane-dense channel width used inside the kernel


# ----------------------------------------------------------------------------
# Fused Pallas kernel: whole network forward pass, activations resident in VMEM.
# ----------------------------------------------------------------------------
def fused_fcn_kernel(*refs, ksizes, L, halo_al, C):
    """refs layout: x_ref, (w0, b0, ..., w{n-1}, b{n-1}), o_ref, act_a, act_b
      x_ref : (N, L, C)   bf16  (NLC, channels already zero-padded to C in wrapper)
      w_i   : (ksize_i*C, C) bf16 (im2col-stacked taps, channel-padded, padded cols = 0)
      b_i   : (1, C)      f32   (padded entries = 0)
      o_ref : (N, L, C)   f32   (lane-dense; caller slices the first c_in channels)
      act_* : (N, Lp, C)  bf16  VMEM ping-pong activation slabs, Lp = halo_al + L + tail
    """
    n_layers = len(ksizes)
    x_ref = refs[0]
    wb = refs[1:1 + 2 * n_layers]
    o_ref = refs[1 + 2 * n_layers]
    act_a, act_b = refs[2 + 2 * n_layers:]
    N = x_ref.shape[0]
    Lp = act_a.shape[1]
    tail = Lp - halo_al - L

    # Zero ONLY the halo rows of both slabs (full-tile, unmasked stores).  The slab
    # interiors are fully overwritten every layer and the input's padded channels
    # arrive already zeroed, so no other zero-fill is needed.
    for slab in (act_a, act_b):
        if halo_al > 0:
            slab[:, :halo_al, :] = jnp.zeros((N, halo_al, C), slab.dtype)
        if tail > 0:
            slab[:, halo_al + L:, :] = jnp.zeros((N, tail, C), slab.dtype)

    # Drop the (tiny, already bf16 + channel-padded) input into the aligned interior.
    act_a[:, halo_al:halo_al + L, :] = x_ref[...]

    src, dst = act_a, act_b
    for i in range(n_layers):                      # unrolled at trace time (5 layers)
        ki = ksizes[i]
        off = halo_al - ki // 2                    # tap-0 offset inside the padded slab
        w_ref = wb[2 * i]
        b_ref = wb[2 * i + 1]

        # Per-tap accumulated MXU matmuls (no wide im2col intermediate, no per-tap cast:
        # slabs are already bf16).  Static weight slices, static tap offsets.
        acc = None
        for k in range(ki):
            tap = src[:, off + k: off + k + L, :].reshape(N * L, C)       # bf16
            part = jnp.dot(tap, w_ref[k * C:(k + 1) * C, :],
                           preferred_element_type=jnp.float32)            # (N*L, C) f32
            acc = part if acc is None else acc + part
        acc = acc + b_ref[...]                     # bias add in f32

        if i < n_layers - 1:
            acc = jnp.maximum(acc, 0.0)            # ReLU on every layer but the last
            # Single bf16 cast on the 128-lane, tile-aligned interior store.
            dst[:, halo_al:halo_al + L, :] = acc.reshape(N, L, C).astype(dst.dtype)
            src, dst = dst, src
        else:
            o_ref[...] = acc.reshape(N, L, C).astype(o_ref.dtype)


# ----------------------------------------------------------------------------
# One-time parameter preparation (run OUTSIDE jit, at model init).
# PyTorch Conv1d weight is (Cout, Cin, ksize); we store (ksize, Cin, Cout).
# ----------------------------------------------------------------------------
def prepare_params(params, C=C_PAD):
    """(ksize, cin, cout) f32 / (1, cout) f32  ->  (ksize*C, C) bf16 / (1, C) f32.
    Padded weight columns and bias entries are exactly zero, so padded channels stay
    zero through bias + ReLU in every layer."""
    flat, ksizes = [], []
    for w, b in params:
        ksize, cin, cout = w.shape
        ksizes.append(ksize)
        w_p = jnp.zeros((ksize, C, C), jnp.float32).at[:, :cin, :cout].set(w)
        w_p = w_p.reshape(ksize * C, C).astype(jnp.bfloat16)   # MXU operand in bf16
        b_p = jnp.zeros((1, C), jnp.float32).at[:, :cout].set(b)
        flat.extend([w_p, b_p])
    return tuple(flat), tuple(ksizes)


def _round_up(x, m):
    return ((x + m - 1) // m) * m


def regression_fcn_forward(x_ncl, flat_params, ksizes):
    """x_ncl: (N, C_in, L) f32 (PyTorch NCL layout). flat_params from prepare_params.
    Returns (N, C_in, L) f32."""
    N, c_in, L = x_ncl.shape
    C = C_PAD
    halo = max(k // 2 for k in ksizes)
    # Sublane-align the interior: leading halo rounded up to 8 rows, total length
    # rounded to a multiple of 8 -> per-layer interior stores are unmasked full tiles.
    halo_al = _round_up(halo, 8) if halo > 0 else 0
    Lp = halo_al + _round_up(L + halo, 8)

    # Tiny layout/pad ops on the (2,4,16) input only; everything else stays in VMEM.
    x_nlc = jnp.transpose(x_ncl, (0, 2, 1)).astype(jnp.bfloat16)          # (N, L, c_in)
    x_pad = jnp.zeros((N, L, C), jnp.bfloat16).at[:, :, :c_in].set(x_nlc)  # lane-dense

    kernel = functools.partial(
        fused_fcn_kernel, ksizes=ksizes, L=L, halo_al=halo_al, C=C)

    out_nlc = pl.pallas_call(
        kernel,
        out_shape=jax.ShapeDtypeStruct((N, L, C), jnp.float32),
        in_specs=[pl.BlockSpec(memory_space=pltpu.MemorySpace.VMEM)] * (1 + len(flat_params)),
        out_specs=pl.BlockSpec(memory_space=pltpu.MemorySpace.VMEM),
        scratch_shapes=[
            pltpu.VMEM((N, Lp, C), jnp.bfloat16),   # ping (bf16: half the bytes)
            pltpu.VMEM((N, Lp, C), jnp.bfloat16),   # pong
        ],
        # NOTE (scaling): at these toy shapes the whole network is one invocation
        # (grid=()), weights (~670 KiB bf16) ride a single exposed DMA (<1 us), and the
        # MXU is idle-bound at M = N*L = 32.  When scaling N/L up:
        #   * tile along L with a `halo`-row overlap, mark that grid axis "parallel"
        #     (dimension_semantics) so v7x's 2 TensorCores both get work;
        #   * size the L-tile so N*L_tile >= 256 (v6e 256x256 MXU) / >= 128 (v5e);
        #   * set pltpu.CompilerParams(vmem_limit_bytes=...) and derive the max tile
        #     from v7x's 64 MiB VMEM/TC (roughly half of what fits v6e's 128 MiB);
        #   * re-evaluate the 32->128 channel pad once the matmul actually dominates.
    )(x_pad, *flat_params)

    # Slice off the padded channels and return in PyTorch's NCL layout.
    return jnp.transpose(out_nlc[:, :, :c_in], (0, 2, 1))


# ----------------------------------------------------------------------------
# Parameter construction (deterministic, PyTorch-default-style uniform init).
# ----------------------------------------------------------------------------
def init_params(key, inshape, num_channels=64, ksize=5, num_layers=4):
    c_in = inshape[0]
    params = []
    in_ch = c_in
    for _ in range(num_layers):
        key, kw, kb = jax.random.split(key, 3)
        bound = 1.0 / jnp.sqrt(in_ch * ksize)
        w = jax.random.uniform(kw, (ksize, in_ch, num_channels), jnp.float32, -bound, bound)
        b = jax.random.uniform(kb, (1, num_channels), jnp.float32, -bound, bound)
        params.append((w, b))
        in_ch = num_channels
    # final 1x1 conv back to c_in channels (no ReLU)
    key, kw, kb = jax.random.split(key, 3)
    bound = 1.0 / jnp.sqrt(num_channels * 1)
    w = jax.random.uniform(kw, (1, num_channels, c_in), jnp.float32, -bound, bound)
    b = jax.random.uniform(kb, (1, c_in), jnp.float32, -bound, bound)
    params.append((w, b))
    return params


# ----------------------------------------------------------------------------
# Pure-JAX reference (f32, no Pallas) for a sanity check.
# ----------------------------------------------------------------------------
def reference_forward(x_ncl, params):
    x = jnp.transpose(x_ncl, (0, 2, 1))          # (N, L, C)
    n_layers = len(params)
    for i, (w, b) in enumerate(params):
        ksize, cin, cout = w.shape
        pad = ksize // 2
        xp = jnp.pad(x, ((0, 0), (pad, pad), (0, 0)))
        L = x.shape[1]
        acc = jnp.zeros((x.shape[0], L, cout), jnp.float32)
        for k in range(ksize):
            acc = acc + jnp.einsum("nlc,co->nlo", xp[:, k:k + L, :], w[k])
        acc = acc + b[None]
        if i < n_layers - 1:
            acc = jnp.maximum(acc, 0.0)
        x = acc
    return jnp.transpose(x, (0, 2, 1))


if __name__ == "__main__":
    # Small shapes consistent with the module: inshape = (C_in, L) = (4, 16)
    batch, c_in, length = 2, 4, 16
    num_channels, ksize, num_layers = 32, 5, 4

    key = jax.random.PRNGKey(0)
    key, kx = jax.random.split(key)
    x = jax.random.normal(kx, (batch, c_in, length), jnp.float32)

    params = init_params(key, (c_in, length), num_channels, ksize, num_layers)

    # Pad/cast weights ONCE, outside the per-call jitted path.
    flat_params, ksizes = prepare_params(params)

    fwd = jax.jit(regression_fcn_forward, static_argnames=("ksizes",))
    out = jax.block_until_ready(fwd(x, flat_params, ksizes=ksizes))
    assert out.shape == (batch, c_in, length), out.shape

    ref = jax.block_until_ready(reference_forward(x, params))
    # bf16 MXU operands -> ~1e-2 drift vs the f32 reference (intentional).
    assert jnp.allclose(out, ref, rtol=2e-2, atol=2e-2), float(jnp.max(jnp.abs(out - ref)))

    print("KERNEL_OK")
</pallas_src>

<mosaic_0001>
module attributes {stable_mosaic.version = 11 : i64} {
  func.func @fused_fcn_kernel(%arg0: memref<2x16x128xbf16, #tpu.memory_space<vmem>>, %arg1: memref<640x128xbf16, #tpu.memory_space<vmem>>, %arg2: memref<1x128xf32, #tpu.memory_space<vmem>>, %arg3: memref<640x128xbf16, #tpu.memory_space<vmem>>, %arg4: memref<1x128xf32, #tpu.memory_space<vmem>>, %arg5: memref<640x128xbf16, #tpu.memory_space<vmem>>, %arg6: memref<1x128xf32, #tpu.memory_space<vmem>>, %arg7: memref<640x128xbf16, #tpu.memory_space<vmem>>, %arg8: memref<1x128xf32, #tpu.memory_space<vmem>>, %arg9: memref<128x128xbf16, #tpu.memory_space<vmem>>, %arg10: memref<1x128xf32, #tpu.memory_space<vmem>>, %arg11: memref<2x16x128xf32, #tpu.memory_space<vmem>>, %arg12: memref<2x32x128xbf16, #tpu.memory_space<vmem>>, %arg13: memref<2x32x128xbf16, #tpu.memory_space<vmem>>) attributes {dimension_semantics = [], scalar_prefetch = 0 : i64, scratch_operands = 2 : i64, tpu.core_type = #tpu.core_type<tc>} {
    %cst = arith.constant 0.000000e+00 : bf16
    %0 = vector.broadcast %cst : bf16 to vector<2x8x128xbf16>
    %c0 = arith.constant 0 : index
    %c0_0 = arith.constant 0 : index
    %c0_1 = arith.constant 0 : index
    %1 = vector.load %arg12[%c0, %c0_0, %c0_1] : memref<2x32x128xbf16, #tpu.memory_space<vmem>>, vector<2x8x128xbf16>
    tpu.vector_store %arg12[%c0, %c0_0, %c0_1], %0 {strides = array<i32>} : memref<2x32x128xbf16, #tpu.memory_space<vmem>>, vector<2x8x128xbf16>,
    %cst_2 = arith.constant 0.000000e+00 : bf16
    %2 = vector.broadcast %cst_2 : bf16 to vector<2x8x128xbf16>
    %c0_3 = arith.constant 0 : index
    %c24 = arith.constant 24 : index
    %c0_4 = arith.constant 0 : index
    %3 = vector.load %arg12[%c0_3, %c24, %c0_4] : memref<2x32x128xbf16, #tpu.memory_space<vmem>>, vector<2x8x128xbf16>
    tpu.vector_store %arg12[%c0_3, %c24, %c0_4], %2 {strides = array<i32>} : memref<2x32x128xbf16, #tpu.memory_space<vmem>>, vector<2x8x128xbf16>,
    %cst_5 = arith.constant 0.000000e+00 : bf16
    %4 = vector.broadcast %cst_5 : bf16 to vector<2x8x128xbf16>
    %c0_6 = arith.constant 0 : index
    %c0_7 = arith.constant 0 : index
    %c0_8 = arith.constant 0 : index
    %5 = vector.load %arg13[%c0_6, %c0_7, %c0_8] : memref<2x32x128xbf16, #tpu.memory_space<vmem>>, vector<2x8x128xbf16>
    tpu.vector_store %arg13[%c0_6, %c0_7, %c0_8], %4 {strides = array<i32>} : memref<2x32x128xbf16, #tpu.memory_space<vmem>>, vector<2x8x128xbf16>,
    %cst_9 = arith.constant 0.000000e+00 : bf16
    %6 = vector.broadcast %cst_9 : bf16 to vector<2x8x128xbf16>
    %c0_10 = arith.constant 0 : index
    %c24_11 = arith.constant 24 : index
    %c0_12 = arith.constant 0 : index
    %7 = vector.load %arg13[%c0_10, %c24_11, %c0_12] : memref<2x32x128xbf16, #tpu.memory_space<vmem>>, vector<2x8x128xbf16>
    tpu.vector_store %arg13[%c0_10, %c24_11, %c0_12], %6 {strides = array<i32>} : memref<2x32x128xbf16, #tpu.memory_space<vmem>>, vector<2x8x128xbf16>,
    %c0_13 = arith.constant 0 : index
    %c0_14 = arith.constant 0 : index
    %c0_15 = arith.constant 0 : index
    %8 = vector.load %arg0[%c0_13, %c0_14, %c0_15] : memref<2x16x128xbf16, #tpu.memory_space<vmem>>, vector<2x16x128xbf16>
    %c0_16 = arith.constant 0 : index
    %c8 = arith.constant 8 : index
    %c0_17 = arith.constant 0 : index
    %9 = vector.load %arg12[%c0_16, %c8, %c0_17] : memref<2x32x128xbf16, #tpu.memory_space<vmem>>, vector<2x16x128xbf16>
    tpu.vector_store %arg12[%c0_16, %c8, %c0_17], %8 {strides = array<i32>} : memref<2x32x128xbf16, #tpu.memory_space<vmem>>, vector<2x16x128xbf16>,
    %c0_18 = arith.constant 0 : index
    %c6 = arith.constant 6 : index
    %c0_19 = arith.constant 0 : index
    %10 = vector.load %arg12[%c0_18, %c6, %c0_19] : memref<2x32x128xbf16, #tpu.memory_space<vmem>>, vector<2x16x128xbf16>
    %11 = vector.shape_cast %10 : vector<2x16x128xbf16> to vector<32x128xbf16>
    %c0_20 = arith.constant 0 : index
    %c0_21 = arith.constant 0 : index
    %12 = vector.load %arg1[%c0_20, %c0_21] : memref<640x128xbf16, #tpu.memory_space<vmem>>, vector<128x128xbf16>
    %cst_22 = arith.constant dense<0.000000e+00> : vector<32x128xf32>
    %13 = tpu.matmul %11, %12, %cst_22 {dimension_numbers = #tpu.dot_dimension_numbers<[1], [0], [0], [1], [0, 0, 1, 1], [], []>} : vector<32x128xbf16>, vector<128x128xbf16>, vector<32x128xf32> -> vector<32x128xf32>
    %c0_23 = arith.constant 0 : index
    %c7 = arith.constant 7 : index
    %c0_24 = arith.constant 0 : index
    %14 = vector.load %arg12[%c0_23, %c7, %c0_24] : memref<2x32x128xbf16, #tpu.memory_space<vmem>>, vector<2x16x128xbf16>
    %15 = vector.shape_cast %14 : vector<2x16x128xbf16> to vector<32x128xbf16>
    %c128 = arith.constant 128 : index
    %c0_25 = arith.constant 0 : index
    %16 = vector.load %arg1[%c128, %c0_25] : memref<640x128xbf16, #tpu.memory_space<vmem>>, vector<128x128xbf16>
    %cst_26 = arith.constant dense<0.000000e+00> : vector<32x128xf32>
    %17 = tpu.matmul %15, %16, %cst_26 {dimension_numbers = #tpu.dot_dimension_numbers<[1], [0], [0], [1], [0, 0, 1, 1], [], []>} : vector<32x128xbf16>, vector<128x128xbf16>, vector<32x128xf32> -> vector<32x128xf32>
    %18 = arith.addf %13, %17 : vector<32x128xf32>
    %c0_27 = arith.constant 0 : index
    %c8_28 = arith.constant 8 : index
    %c0_29 = arith.constant 0 : index
    %19 = vector.load %arg12[%c0_27, %c8_28, %c0_29] : memref<2x32x128xbf16, #tpu.memory_space<vmem>>, vector<2x16x128xbf16>
    %20 = vector.shape_cast %19 : vector<2x16x128xbf16> to vector<32x128xbf16>
    %c256 = arith.constant 256 : index
    %c0_30 = arith.constant 0 : index
    %21 = vector.load %arg1[%c256, %c0_30] : memref<640x128xbf16, #tpu.memory_space<vmem>>, vector<128x128xbf16>
    %cst_31 = arith.constant dense<0.000000e+00> : vector<32x128xf32>
    %22 = tpu.matmul %20, %21, %cst_31 {dimension_numbers = #tpu.dot_dimension_numbers<[1], [0], [0], [1], [0, 0, 1, 1], [], []>} : vector<32x128xbf16>, vector<128x128xbf16>, vector<32x128xf32> -> vector<32x128xf32>
    %23 = arith.addf %18, %22 : vector<32x128xf32>
    %c0_32 = arith.constant 0 : index
    %c9 = arith.constant 9 : index
    %c0_33 = arith.constant 0 : index
    %24 = vector.load %arg12[%c0_32, %c9, %c0_33] : memref<2x32x128xbf16, #tpu.memory_space<vmem>>, vector<2x16x128xbf16>
    %25 = vector.shape_cast %24 : vector<2x16x128xbf16> to vector<32x128xbf16>
    %c384 = arith.constant 384 : index
    %c0_34 = arith.constant 0 : index
    %26 = vector.load %arg1[%c384, %c0_34] : memref<640x128xbf16, #tpu.memory_space<vmem>>, vector<128x128xbf16>
    %cst_35 = arith.constant dense<0.000000e+00> : vector<32x128xf32>
    %27 = tpu.matmul %25, %26, %cst_35 {dimension_numbers = #tpu.dot_dimension_numbers<[1], [0], [0], [1], [0, 0, 1, 1], [], []>} : vector<32x128xbf16>, vector<128x128xbf16>, vector<32x128xf32> -> vector<32x128xf32>
    %28 = arith.addf %23, %27 : vector<32x128xf32>
    %c0_36 = arith.constant 0 : index
    %c10 = arith.constant 10 : index
    %c0_37 = arith.constant 0 : index
    %29 = vector.load %arg12[%c0_36, %c10, %c0_37] : memref<2x32x128xbf16, #tpu.memory_space<vmem>>, vector<2x16x128xbf16>
    %30 = vector.shape_cast %29 : vector<2x16x128xbf16> to vector<32x128xbf16>
    %c512 = arith.constant 512 : index
    %c0_38 = arith.constant 0 : index
    %31 = vector.load %arg1[%c512, %c0_38] : memref<640x128xbf16, #tpu.memory_space<vmem>>, vector<128x128xbf16>
    %cst_39 = arith.constant dense<0.000000e+00> : vector<32x128xf32>
    %32 = tpu.matmul %30, %31, %cst_39 {dimension_numbers = #tpu.dot_dimension_numbers<[1], [0], [0], [1], [0, 0, 1, 1], [], []>} : vector<32x128xbf16>, vector<128x128xbf16>, vector<32x128xf32> -> vector<32x128xf32>
    %33 = arith.addf %28, %32 : vector<32x128xf32>
    %c0_40 = arith.constant 0 : index
    %c0_41 = arith.constant 0 : index
    %34 = vector.load %arg2[%c0_40, %c0_41] : memref<1x128xf32, #tpu.memory_space<vmem>>, vector<1x128xf32>
    %35 = vector.broadcast %34 : vector<1x128xf32> to vector<32x128xf32>
    %36 = arith.addf %33, %35 : vector<32x128xf32>
    %cst_42 = arith.constant 0.000000e+00 : f32
    %37 = vector.broadcast %cst_42 : f32 to vector<32x128xf32>
    %38 = arith.maximumf %36, %37 : vector<32x128xf32>
    %39 = vector.shape_cast %38 : vector<32x128xf32> to vector<2x16x128xf32>
    %40 = arith.truncf %39 : vector<2x16x128xf32> to vector<2x16x128xbf16>
    %c0_43 = arith.constant 0 : index
    %c8_44 = arith.constant 8 : index
    %c0_45 = arith.constant 0 : index
    %41 = vector.load %arg13[%c0_43, %c8_44, %c0_45] : memref<2x32x128xbf16, #tpu.memory_space<vmem>>, vector<2x16x128xbf16>
    tpu.vector_store %arg13[%c0_43, %c8_44, %c0_45], %40 {strides = array<i32>} : memref<2x32x128xbf16, #tpu.memory_space<vmem>>, vector<2x16x128xbf16>,
    %c0_46 = arith.constant 0 : index
    %c6_47 = arith.constant 6 : index
    %c0_48 = arith.constant 0 : index
    %42 = vector.load %arg13[%c0_46, %c6_47, %c0_48] : memref<2x32x128xbf16, #tpu.memory_space<vmem>>, vector<2x16x128xbf16>
    %43 = vector.shape_cast %42 : vector<2x16x128xbf16> to vector<32x128xbf16>
    %c0_49 = arith.constant 0 : index
    %c0_50 = arith.constant 0 : index
    %44 = vector.load %arg3[%c0_49, %c0_50] : memref<640x128xbf16, #tpu.memory_space<vmem>>, vector<128x128xbf16>
    %cst_51 = arith.constant dense<0.000000e+00> : vector<32x128xf32>
    %45 = tpu.matmul %43, %44, %cst_51 {dimension_numbers = #tpu.dot_dimension_numbers<[1], [0], [0], [1], [0, 0, 1, 1], [], []>} : vector<32x128xbf16>, vector<128x128xbf16>, vector<32x128xf32> -> vector<32x128xf32>
    %c0_52 = arith.constant 0 : index
    %c7_53 = arith.constant 7 : index
    %c0_54 = arith.constant 0 : index
    %46 = vector.load %arg13[%c0_52, %c7_53, %c0_54] : memref<2x32x128xbf16, #tpu.memory_space<vmem>>, vector<2x16x128xbf16>
    %47 = vector.shape_cast %46 : vector<2x16x128xbf16> to vector<32x128xbf16>
    %c128_55 = arith.constant 128 : index
    %c0_56 = arith.constant 0 : index
    %48 = vector.load %arg3[%c128_55, %c0_56] : memref<640x128xbf16, #tpu.memory_space<vmem>>, vector<128x128xbf16>
    %cst_57 = arith.constant dense<0.000000e+00> : vector<32x128xf32>
    %49 = tpu.matmul %47, %48, %cst_57 {dimension_numbers = #tpu.dot_dimension_numbers<[1], [0], [0], [1], [0, 0, 1, 1], [], []>} : vector<32x128xbf16>, vector<128x128xbf16>, vector<32x128xf32> -> vector<32x128xf32>
    %50 = arith.addf %45, %49 : vector<32x128xf32>
    %c0_58 = arith.constant 0 : index
    %c8_59 = arith.constant 8 : index
    %c0_60 = arith.constant 0 : index
    %51 = vector.load %arg13[%c0_58, %c8_59, %c0_60] : memref<2x32x128xbf16, #tpu.memory_space<vmem>>, vector<2x16x128xbf16>
    %52 = vector.shape_cast %51 : vector<2x16x128xbf16> to vector<32x128xbf16>
    %c256_61 = arith.constant 256 : index
    %c0_62 = arith.constant 0 : index
    %53 = vector.load %arg3[%c256_61, %c0_62] : memref<640x128xbf16, #tpu.memory_space<vmem>>, vector<128x128xbf16>
    %cst_63 = arith.constant dense<0.000000e+00> : vector<32x128xf32>
    %54 = tpu.matmul %52, %53, %cst_63 {dimension_numbers = #tpu.dot_dimension_numbers<[1], [0], [0], [1], [0, 0, 1, 1], [], []>} : vector<32x128xbf16>, vector<128x128xbf16>, vector<32x128xf32> -> vector<32x128xf32>
    %55 = arith.addf %50, %54 : vector<32x128xf32>
    %c0_64 = arith.constant 0 : index
    %c9_65 = arith.constant 9 : index
    %c0_66 = arith.constant 0 : index
    %56 = vector.load %arg13[%c0_64, %c9_65, %c0_66] : memref<2x32x128xbf16, #tpu.memory_space<vmem>>, vector<2x16x128xbf16>
    %57 = vector.shape_cast %56 : vector<2x16x128xbf16> to vector<32x128xbf16>
    %c384_67 = arith.constant 384 : index
    %c0_68 = arith.constant 0 : index
    %58 = vector.load %arg3[%c384_67, %c0_68] : memref<640x128xbf16, #tpu.memory_space<vmem>>, vector<128x128xbf16>
    %cst_69 = arith.constant dense<0.000000e+00> : vector<32x128xf32>
    %59 = tpu.matmul %57, %58, %cst_69 {dimension_numbers = #tpu.dot_dimension_numbers<[1], [0], [0], [1], [0, 0, 1, 1], [], []>} : vector<32x128xbf16>, vector<128x128xbf16>, vector<32x128xf32> -> vector<32x128xf32>
    %60 = arith.addf %55, %59 : vector<32x128xf32>
    %c0_70 = arith.constant 0 : index
    %c10_71 = arith.constant 10 : index
    %c0_72 = arith.constant 0 : index
    %61 = vector.load %arg13[%c0_70, %c10_71, %c0_72] : memref<2x32x128xbf16, #tpu.memory_space<vmem>>, vector<2x16x128xbf16>
    %62 = vector.shape_cast %61 : vector<2x16x128xbf16> to vector<32x128xbf16>
    %c512_73 = arith.constant 512 : index
    %c0_74 = arith.constant 0 : index
    %63 = vector.load %arg3[%c512_73, %c0_74] : memref<640x128xbf16, #tpu.memory_space<vmem>>, vector<128x128xbf16>
    %cst_75 = arith.constant dense<0.000000e+00> : vector<32x128xf32>
    %64 = tpu.matmul %62, %63, %cst_75 {dimension_numbers = #tpu.dot_dimension_numbers<[1], [0], [0], [1], [0, 0, 1, 1], [], []>} : vector<32x128xbf16>, vector<128x128xbf16>, vector<32x128xf32> -> vector<32x128xf32>
    %65 = arith.addf %60, %64 : vector<32x128xf32>
    %c0_76 = arith.constant 0 : index
    %c0_77 = arith.constant 0 : index
    %66 = vector.load %arg4[%c0_76, %c0_77] : memref<1x128xf32, #tpu.memory_space<vmem>>, vector<1x128xf32>
    %67 = vector.broadcast %66 : vector<1x128xf32> to vector<32x128xf32>
    %68 = arith.addf %65, %67 : vector<32x128xf32>
    %cst_78 = arith.constant 0.000000e+00 : f32
    %69 = vector.broadcast %cst_78 : f32 to vector<32x128xf32>
    %70 = arith.maximumf %68, %69 : vector<32x128xf32>
    %71 = vector.shape_cast %70 : vector<32x128xf32> to vector<2x16x128xf32>
    %72 = arith.truncf %71 : vector<2x16x128xf32> to vector<2x16x128xbf16>
    %c0_79 = arith.constant 0 : index
    %c8_80 = arith.constant 8 : index
    %c0_81 = arith.constant 0 : index
    %73 = vector.load %arg12[%c0_79, %c8_80, %c0_81] : memref<2x32x128xbf16, #tpu.memory_space<vmem>>, vector<2x16x128xbf16>
    tpu.vector_store %arg12[%c0_79, %c8_80, %c0_81], %72 {strides = array<i32>} : memref<2x32x128xbf16, #tpu.memory_space<vmem>>, vector<2x16x128xbf16>,
    %c0_82 = arith.constant 0 : index
    %c6_83 = arith.constant 6 : index
    %c0_84 = arith.constant 0 : index
    %74 = vector.load %arg12[%c0_82, %c6_83, %c0_84] : memref<2x32x128xbf16, #tpu.memory_space<vmem>>, vector<2x16x128xbf16>
    %75 = vector.shape_cast %74 : vector<2x16x128xbf16> to vector<32x128xbf16>
    %c0_85 = arith.constant 0 : index
    %c0_86 = arith.constant 0 : index
    %76 = vector.load %arg5[%c0_85, %c0_86] : memref<640x128xbf16, #tpu.memory_space<vmem>>, vector<128x128xbf16>
    %cst_87 = arith.constant dense<0.000000e+00> : vector<32x128xf32>
    %77 = tpu.matmul %75, %76, %cst_87 {dimension_numbers = #tpu.dot_dimension_numbers<[1], [0], [0], [1], [0, 0, 1, 1], [], []>} : vector<32x128xbf16>, vector<128x128xbf16>, vector<32x128xf32> -> vector<32x128xf32>
    %c0_88 = arith.constant 0 : index
    %c7_89 = arith.constant 7 : index
    %c0_90 = arith.constant 0 : index
    %78 = vector.load %arg12[%c0_88, %c7_89, %c0_90] : memref<2x32x128xbf16, #tpu.memory_space<vmem>>, vector<2x16x128xbf16>
    %79 = vector.shape_cast %78 : vector<2x16x128xbf16> to vector<32x128xbf16>
    %c128_91 = arith.constant 128 : index
    %c0_92 = arith.constant 0 : index
    %80 = vector.load %arg5[%c128_91, %c0_92] : memref<640x128xbf16, #tpu.memory_space<vmem>>, vector<128x128xbf16>
    %cst_93 = arith.constant dense<0.000000e+00> : vector<32x128xf32>
    %81 = tpu.matmul %79, %80, %cst_93 {dimension_numbers = #tpu.dot_dimension_numbers<[1], [0], [0], [1], [0, 0, 1, 1], [], []>} : vector<32x128xbf16>, vector<128x128xbf16>, vector<32x128xf32> -> vector<32x128xf32>
    %82 = arith.addf %77, %81 : vector<32x128xf32>
    %c0_94 = arith.constant 0 : index
    %c8_95 = arith.constant 8 : index
    %c0_96 = arith.constant 0 : index
    %83 = vector.load %arg12[%c0_94, %c8_95, %c0_96] : memref<2x32x128xbf16, #tpu.memory_space<vmem>>, vector<2x16x128xbf16>
    %84 = vector.shape_cast %83 : vector<2x16x128xbf16> to vector<32x128xbf16>
    %c256_97 = arith.constant 256 : index
    %c0_98 = arith.constant 0 : index
    %85 = vector.load %arg5[%c256_97, %c0_98] : memref<640x128xbf16, #tpu.memory_space<vmem>>, vector<128x128xbf16>
    %cst_99 = arith.constant dense<0.000000e+00> : vector<32x128xf32>
    %86 = tpu.matmul %84, %85, %cst_99 {dimension_numbers = #tpu.dot_dimension_numbers<[1], [0], [0], [1], [0, 0, 1, 1], [], []>} : vector<32x128xbf16>, vector<128x128xbf16>, vector<32x128xf32> -> vector<32x128xf32>
    %87 = arith.addf %82, %86 : vector<32x128xf32>
    %c0_100 = arith.constant 0 : index
    %c9_101 = arith.constant 9 : index
    %c0_102 = arith.constant 0 : index
    %88 = vector.load %arg12[%c0_100, %c9_101, %c0_102] : memref<2x32x128xbf16, #tpu.memory_space<vmem>>, vector<2x16x128xbf16>
    %89 = vector.shape_cast %88 : vector<2x16x128xbf16> to vector<32x128xbf16>
    %c384_103 = arith.constant 384 : index
    %c0_104 = arith.constant 0 : index
    %90 = vector.load %arg5[%c384_103, %c0_104] : memref<640x128xbf16, #tpu.memory_space<vmem>>, vector<128x128xbf16>
    %cst_105 = arith.constant dense<0.000000e+00> : vector<32x128xf32>
    %91 = tpu.matmul %89, %90, %cst_105 {dimension_numbers = #tpu.dot_dimension_numbers<[1], [0], [0], [1], [0, 0, 1, 1], [], []>} : vector<32x128xbf16>, vector<128x128xbf16>, vector<32x128xf32> -> vector<32x128xf32>
    %92 = arith.addf %87, %91 : vector<32x128xf32>
    %c0_106 = arith.constant 0 : index
    %c10_107 = arith.constant 10 : index
    %c0_108 = arith.constant 0 : index
    %93 = vector.load %arg12[%c0_106, %c10_107, %c0_108] : memref<2x32x128xbf16, #tpu.memory_space<vmem>>, vector<2x16x128xbf16>
    %94 = vector.shape_cast %93 : vector<2x16x128xbf16> to vector<32x128xbf16>
    %c512_109 = arith.constant 512 : index
    %c0_110 = arith.constant 0 : index
    %95 = vector.load %arg5[%c512_109, %c0_110] : memref<640x128xbf16, #tpu.memory_space<vmem>>, vector<128x128xbf16>
    %cst_111 = arith.constant dense<0.000000e+00> : vector<32x128xf32>
    %96 = tpu.matmul %94, %95, %cst_111 {dimension_numbers = #tpu.dot_dimension_numbers<[1], [0], [0], [1], [0, 0, 1, 1], [], []>} : vector<32x128xbf16>, vector<128x128xbf16>, vector<32x128xf32> -> vector<32x128xf32>
    %97 = arith.addf %92, %96 : vector<32x128xf32>
    %c0_112 = arith.constant 0 : index
    %c0_113 = arith.constant 0 : index
    %98 = vector.load %arg6[%c0_112, %c0_113] : memref<1x128xf32, #tpu.memory_space<vmem>>, vector<1x128xf32>
    %99 = vector.broadcast %98 : vector<1x128xf32> to vector<32x128xf32>
    %100 = arith.addf %97, %99 : vector<32x128xf32>
    %cst_114 = arith.constant 0.000000e+00 : f32
    %101 = vector.broadcast %cst_114 : f32 to vector<32x128xf32>
    %102 = arith.maximumf %100, %101 : vector<32x128xf32>
    %103 = vector.shape_cast %102 : vector<32x128xf32> to vector<2x16x128xf32>
    %104 = arith.truncf %103 : vector<2x16x128xf32> to vector<2x16x128xbf16>
    %c0_115 = arith.constant 0 : index
    %c8_116 = arith.constant 8 : index
    %c0_117 = arith.constant 0 : index
    %105 = vector.load %arg13[%c0_115, %c8_116, %c0_117] : memref<2x32x128xbf16, #tpu.memory_space<vmem>>, vector<2x16x128xbf16>
    tpu.vector_store %arg13[%c0_115, %c8_116, %c0_117], %104 {strides = array<i32>} : memref<2x32x128xbf16, #tpu.memory_space<vmem>>, vector<2x16x128xbf16>,
    %c0_118 = arith.constant 0 : index
    %c6_119 = arith.constant 6 : index
    %c0_120 = arith.constant 0 : index
    %106 = vector.load %arg13[%c0_118, %c6_119, %c0_120] : memref<2x32x128xbf16, #tpu.memory_space<vmem>>, vector<2x16x128xbf16>
    %107 = vector.shape_cast %106 : vector<2x16x128xbf16> to vector<32x128xbf16>
    %c0_121 = arith.constant 0 : index
    %c0_122 = arith.constant 0 : index
    %108 = vector.load %arg7[%c0_121, %c0_122] : memref<640x128xbf16, #tpu.memory_space<vmem>>, vector<128x128xbf16>
    %cst_123 = arith.constant dense<0.000000e+00> : vector<32x128xf32>
    %109 = tpu.matmul %107, %108, %cst_123 {dimension_numbers = #tpu.dot_dimension_numbers<[1], [0], [0], [1], [0, 0, 1, 1], [], []>} : vector<32x128xbf16>, vector<128x128xbf16>, vector<32x128xf32> -> vector<32x128xf32>
    %c0_124 = arith.constant 0 : index
    %c7_125 = arith.constant 7 : index
    %c0_126 = arith.constant 0 : index
    %110 = vector.load %arg13[%c0_124, %c7_125, %c0_126] : memref<2x32x128xbf16, #tpu.memory_space<vmem>>, vector<2x16x128xbf16>
    %111 = vector.shape_cast %110 : vector<2x16x128xbf16> to vector<32x128xbf16>
    %c128_127 = arith.constant 128 : index
    %c0_128 = arith.constant 0 : index
    %112 = vector.load %arg7[%c128_127, %c0_128] : memref<640x128xbf16, #tpu.memory_space<vmem>>, vector<128x128xbf16>
    %cst_129 = arith.constant dense<0.000000e+00> : vector<32x128xf32>
    %113 = tpu.matmul %111, %112, %cst_129 {dimension_numbers = #tpu.dot_dimension_numbers<[1], [0], [0], [1], [0, 0, 1, 1], [], []>} : vector<32x128xbf16>, vector<128x128xbf16>, vector<32x128xf32> -> vector<32x128xf32>
    %114 = arith.addf %109, %113 : vector<32x128xf32>
    %c0_130 = arith.constant 0 : index
    %c8_131 = arith.constant 8 : index
    %c0_132 = arith.constant 0 : index
    %115 = vector.load %arg13[%c0_130, %c8_131, %c0_132] : memref<2x32x128xbf16, #tpu.memory_space<vmem>>, vector<2x16x128xbf16>
    %116 = vector.shape_cast %115 : vector<2x16x128xbf16> to vector<32x128xbf16>
    %c256_133 = arith.constant 256 : index
    %c0_134 = arith.constant 0 : index
    %117 = vector.load %arg7[%c256_133, %c0_134] : memref<640x128xbf16, #tpu.memory_space<vmem>>, vector<128x128xbf16>
    %cst_135 = arith.constant dense<0.000000e+00> : vector<32x128xf32>
    %118 = tpu.matmul %116, %117, %cst_135 {dimension_numbers = #tpu.dot_dimension_numbers<[1], [0], [0], [1], [0, 0, 1, 1], [], []>} : vector<32x128xbf16>, vector<128x128xbf16>, vector<32x128xf32> -> vector<32x128xf32>
    %119 = arith.addf %114, %118 : vector<32x128xf32>
    %c0_136 = arith.constant 0 : index
    %c9_137 = arith.constant 9 : index
    %c0_138 = arith.constant 0 : index
    %120 = vector.load %arg13[%c0_136, %c9_137, %c0_138] : memref<2x32x128xbf16, #tpu.memory_space<vmem>>, vector<2x16x128xbf16>
    %121 = vector.shape_cast %120 : vector<2x16x128xbf16> to vector<32x128xbf16>
    %c384_139 = arith.constant 384 : index
    %c0_140 = arith.constant 0 : index
    %122 = vector.load %arg7[%c384_139, %c0_140] : memref<640x128xbf16, #tpu.memory_space<vmem>>, vector<128x128xbf16>
    %cst_141 = arith.constant dense<0.000000e+00> : vector<32x128xf32>
    %123 = tpu.matmul %121, %122, %cst_141 {dimension_numbers = #tpu.dot_dimension_numbers<[1], [0], [0], [1], [0, 0, 1, 1], [], []>} : vector<32x128xbf16>, vector<128x128xbf16>, vector<32x128xf32> -> vector<32x128xf32>
    %124 = arith.addf %119, %123 : vector<32x128xf32>
    %c0_142 = arith.constant 0 : index
    %c10_143 = arith.constant 10 : index
    %c0_144 = arith.constant 0 : index
    %125 = vector.load %arg13[%c0_142, %c10_143, %c0_144] : memref<2x32x128xbf16, #tpu.memory_space<vmem>>, vector<2x16x128xbf16>
    %126 = vector.shape_cast %125 : vector<2x16x128xbf16> to vector<32x128xbf16>
    %c512_145 = arith.constant 512 : index
    %c0_146 = arith.constant 0 : index
    %127 = vector.load %arg7[%c512_145, %c0_146] : memref<640x128xbf16, #tpu.memory_space<vmem>>, vector<128x128xbf16>
    %cst_147 = arith.constant dense<0.000000e+00> : vector<32x128xf32>
    %128 = tpu.matmul %126, %127, %cst_147 {dimension_numbers = #tpu.dot_dimension_numbers<[1], [0], [0], [1], [0, 0, 1, 1], [], []>} : vector<32x128xbf16>, vector<128x128xbf16>, vector<32x128xf32> -> vector<32x128xf32>
    %129 = arith.addf %124, %128 : vector<32x128xf32>
    %c0_148 = arith.constant 0 : index
    %c0_149 = arith.constant 0 : index
    %130 = vector.load %arg8[%c0_148, %c0_149] : memref<1x128xf32, #tpu.memory_space<vmem>>, vector<1x128xf32>
    %131 = vector.broadcast %130 : vector<1x128xf32> to vector<32x128xf32>
    %132 = arith.addf %129, %131 : vector<32x128xf32>
    %cst_150 = arith.constant 0.000000e+00 : f32
    %133 = vector.broadcast %cst_150 : f32 to vector<32x128xf32>
    %134 = arith.maximumf %132, %133 : vector<32x128xf32>
    %135 = vector.shape_cast %134 : vector<32x128xf32> to vector<2x16x128xf32>
    %136 = arith.truncf %135 : vector<2x16x128xf32> to vector<2x16x128xbf16>
    %c0_151 = arith.constant 0 : index
    %c8_152 = arith.constant 8 : index
    %c0_153 = arith.constant 0 : index
    %137 = vector.load %arg12[%c0_151, %c8_152, %c0_153] : memref<2x32x128xbf16, #tpu.memory_space<vmem>>, vector<2x16x128xbf16>
    tpu.vector_store %arg12[%c0_151, %c8_152, %c0_153], %136 {strides = array<i32>} : memref<2x32x128xbf16, #tpu.memory_space<vmem>>, vector<2x16x128xbf16>,
    %c0_154 = arith.constant 0 : index
    %c8_155 = arith.constant 8 : index
    %c0_156 = arith.constant 0 : index
    %138 = vector.load %arg12[%c0_154, %c8_155, %c0_156] : memref<2x32x128xbf16, #tpu.memory_space<vmem>>, vector<2x16x128xbf16>
    %139 = vector.shape_cast %138 : vector<2x16x128xbf16> to vector<32x128xbf16>
    %c0_157 = arith.constant 0 : index
    %c0_158 = arith.constant 0 : index
    %140 = vector.load %arg9[%c0_157, %c0_158] : memref<128x128xbf16, #tpu.memory_space<vmem>>, vector<128x128xbf16>
    %cst_159 = arith.constant dense<0.000000e+00> : vector<32x128xf32>
    %141 = tpu.matmul %139, %140, %cst_159 {dimension_numbers = #tpu.dot_dimension_numbers<[1], [0], [0], [1], [0, 0, 1, 1], [], []>} : vector<32x128xbf16>, vector<128x128xbf16>, vector<32x128xf32> -> vector<32x128xf32>
    %c0_160 = arith.constant 0 : index
    %c0_161 = arith.constant 0 : index
    %142 = vector.load %arg10[%c0_160, %c0_161] : memref<1x128xf32, #tpu.memory_space<vmem>>, vector<1x128xf32>
    %143 = vector.broadcast %142 : vector<1x128xf32> to vector<32x128xf32>
    %144 = arith.addf %141, %143 : vector<32x128xf32>
    %145 = vector.shape_cast %144 : vector<32x128xf32> to vector<2x16x128xf32>
    %c0_162 = arith.constant 0 : index
    %c0_163 = arith.constant 0 : index
    %c0_164 = arith.constant 0 : index
    %146 = vector.load %arg11[%c0_162, %c0_163, %c0_164] : memref<2x16x128xf32, #tpu.memory_space<vmem>>, vector<2x16x128xf32>
    tpu.vector_store %arg11[%c0_162, %c0_163, %c0_164], %145 {strides = array<i32>} : memref<2x16x128xf32, #tpu.memory_space<vmem>>, vector<2x16x128xf32>,
    return
  }
}

</mosaic_0001>

<llo_original>
// kernel: regression_fcn_forward.1
$region0: #{regression_fcn_forward.1}
  #allocation0 [shape = 'u32[]', space=smem, size = 0x4, offset = 0x4, fixed_abs, tag = 'smem constant byte address 0x4 - core index']
  #allocation1 [shape = 'u32[72,128]{1,0:T(1,128)}', space=vmem, size = 0x9000, scoped, tag = 'internal scratch']
  #allocation2 [shape = 'bf16[2,32,128]{2,1,0:T(8,128)(2,1)}', space=vmem, size = 0x4000, scoped, tag = 'scratch operand']
  #allocation3 [shape = 'bf16[2,32,128]{2,1,0:T(8,128)(2,1)}', space=vmem, size = 0x4000, scoped, tag = 'scratch operand']
  %s0 = inlined_call_operand.vmem [shape: bf16[2,16,128], index: 0, kind: input, shape index: {}]
  %s1 = inlined_call_operand.hbm [shape: bf16[640,128], index: 1, kind: input, shape index: {}]
  %s2 = inlined_call_operand.vmem [shape: f32[1,128], index: 2, kind: input, shape index: {}]
  %s3 = inlined_call_operand.hbm [shape: bf16[640,128], index: 3, kind: input, shape index: {}]
  %s4 = inlined_call_operand.vmem [shape: f32[1,128], index: 4, kind: input, shape index: {}]
  %s5 = inlined_call_operand.hbm [shape: bf16[640,128], index: 5, kind: input, shape index: {}]
  %s6 = inlined_call_operand.vmem [shape: f32[1,128], index: 6, kind: input, shape index: {}]
  %s7 = inlined_call_operand.hbm [shape: bf16[640,128], index: 7, kind: input, shape index: {}]
  %s8 = inlined_call_operand.vmem [shape: f32[1,128], index: 8, kind: input, shape index: {}]
  %s9 = inlined_call_operand.vmem [shape: bf16[128,128], index: 9, kind: input, shape index: {}]
  %s10 = inlined_call_operand.vmem [shape: f32[1,128], index: 10, kind: input, shape index: {}]
  %s11 = inlined_call_operand.vmem [shape: f32[2,16,128], index: 11, kind: output, shape index: {}]
  %s12 = sld [smem:[#allocation0]]
  $region70: #{regression_fcn_forward.1} parent=0
    _
  %s14 = ssub.s32 1, %s12
  %s15 = scalar_select 0, %s14, %s12
  $region1: #{regression_fcn_forward.1} parent=0
    #allocation4 [shape = 'u8[163840]{0}', space=vmem, size = 0x28000, scoped, tag = 'input window, operand 1, single buffered']
    #allocation5 [shape = 's32[1]{0}', space=sflag, size = 0x4, scoped, tag = 'scoped memory for regression_fcn_forward.1']
    #allocation6 [shape = 'u8[163840]{0}', space=vmem, size = 0x28000, scoped, tag = 'input window, operand 3, single buffered']
    #allocation7 [shape = 's32[1]{0}', space=sflag, size = 0x4, scoped, tag = 'scoped memory for regression_fcn_forward.1']
    #allocation8 [shape = 'u8[163840]{0}', space=vmem, size = 0x28000, scoped, tag = 'input window, operand 5, single buffered']
    #allocation9 [shape = 'u8[163840]{0}', space=vmem, size = 0x28000, scoped, tag = 'input window, operand 7, single buffered']
    #allocation10 [shape = 's32[1]{0}', space=sflag, size = 0x4, scoped, tag = 'scoped memory for regression_fcn_forward.1']
    %16 = vsyncpa [#allocation5], 0
    %17 = vsyncpa [#allocation7], 0
    %18 = vsyncpa [#allocation10], 0
    // Predicated region
    $region2: #{regression_fcn_forward.1} parent=1 // pred_check
      _
    $region3: #{regression_fcn_forward.1} parent=1 // pred_check_branch
      %20 = sbr.rel (0) target = $region5
    $region4: #{regression_fcn_forward.1} parent=1 // pred_region
      _
    $region5: #{regression_fcn_forward.1} parent=1 // pred_fallthru
      _
    // Predicated region
    $region6: #{regression_fcn_forward.1} parent=1 // pred_check
      _
    $region7: #{regression_fcn_forward.1} parent=1 // pred_check_branch
      %22 = sbr.rel (0) target = $region9
    $region8: #{regression_fcn_forward.1} parent=1 // pred_region
      %24 = vsyncadd [#allocation5], 0
      %s25 = sshll.u32 %s1, 4
      %s26 = int_to_ptr.hbm [resolvable:$true] %s25
      %s27 = sshll.u32 [#allocation4], 4
      %s28 = int_to_ptr.vmem [resolvable:$true] %s27
      %33 = dma.hbm_to_vmem [thread:$0]  %s26, 5120, %s28, [#allocation5], 64, 64, 4
    $region9: #{regression_fcn_forward.1} parent=1 // pred_fallthru
      _
    // Predicated region
    $region10: #{regression_fcn_forward.1} parent=1 // pred_check
      _
    $region11: #{regression_fcn_forward.1} parent=1 // pred_check_branch
      %35 = sbr.rel (0) target = $region13
    $region12: #{regression_fcn_forward.1} parent=1 // pred_region
      _
    $region13: #{regression_fcn_forward.1} parent=1 // pred_fallthru
      _
    // Predicated region
    $region14: #{regression_fcn_forward.1} parent=1 // pred_check
      _
    $region15: #{regression_fcn_forward.1} parent=1 // pred_check_branch
      %37 = sbr.rel (0) target = $region17
    $region16: #{regression_fcn_forward.1} parent=1 // pred_region
      %39 = vsyncadd [#allocation7], 0
      %s40 = sshll.u32 %s3, 4
      %s41 = int_to_ptr.hbm [resolvable:$true] %s40
      %s42 = sshll.u32 [#allocation6], 4
      %s43 = int_to_ptr.vmem [resolvable:$true] %s42
      %48 = dma.hbm_to_vmem [thread:$0]  %s41, 5120, %s43, [#allocation7], 64, 64, 4
    $region17: #{regression_fcn_forward.1} parent=1 // pred_fallthru
      _
    // Predicated region
    $region18: #{regression_fcn_forward.1} parent=1 // pred_check
      _
    $region19: #{regression_fcn_forward.1} parent=1 // pred_check_branch
      %50 = sbr.rel (0) target = $region21
    $region20: #{regression_fcn_forward.1} parent=1 // pred_region
      _
    $region21: #{regression_fcn_forward.1} parent=1 // pred_fallthru
      _
    // Predicated region
    $region22: #{regression_fcn_forward.1} parent=1 // pred_check
      _
    $region23: #{regression_fcn_forward.1} parent=1 // pred_check_branch
      %52 = sbr.rel (0) target = $region25
    $region24: #{regression_fcn_forward.1} parent=1 // pred_region
      %54 = vsyncadd [#allocation7], 0
      %s55 = sshll.u32 %s5, 4
      %s56 = int_to_ptr.hbm [resolvable:$true] %s55
      %s57 = sshll.u32 [#allocation8], 4
      %s58 = int_to_ptr.vmem [resolvable:$true] %s57
      %63 = dma.hbm_to_vmem [thread:$0]  %s56, 5120, %s58, [#allocation7], 64, 64, 4
    $region25: #{regression_fcn_forward.1} parent=1 // pred_fallthru
      _
    // Predicated region
    $region26: #{regression_fcn_forward.1} parent=1 // pred_check
      _
    $region27: #{regression_fcn_forward.1} parent=1 // pred_check_branch
      %65 = sbr.rel (0) target = $region29
    $region28: #{regression_fcn_forward.1} parent=1 // pred_region
      _
    $region29: #{regression_fcn_forward.1} parent=1 // pred_fallthru
      _
    // Predicated region
    $region30: #{regression_fcn_forward.1} parent=1 // pred_check
      _
    $region31: #{regression_fcn_forward.1} parent=1 // pred_check_branch
      %67 = sbr.rel (0) target = $region33
    $region32: #{regression_fcn_forward.1} parent=1 // pred_region
      %69 = vsyncadd [#allocation10], 0
      %s70 = sshll.u32 %s7, 4
      %s71 = int_to_ptr.hbm [resolvable:$true] %s70
      %s72 = sshll.u32 [#allocation9], 4
      %s73 = int_to_ptr.vmem [resolvable:$true] %s72
      %78 = dma.hbm_to_vmem [thread:$0]  %s71, 5120, %s73, [#allocation10], 64, 64, 4
    $region33: #{regression_fcn_forward.1} parent=1 // pred_fallthru
      _
    // Predicated region
    $region34: #{regression_fcn_forward.1} parent=1 // pred_check
      _
    $region35: #{regression_fcn_forward.1} parent=1 // pred_check_branch
      %80 = sbr.rel (0) target = $region37
    $region36: #{regression_fcn_forward.1} parent=1 // pred_region
      _
    $region37: #{regression_fcn_forward.1} parent=1 // pred_fallthru
      _
    // Predicated region
    $region38: #{regression_fcn_forward.1} parent=1 // pred_check
      _
    $region39: #{regression_fcn_forward.1} parent=1 // pred_check_branch
      %82 = sbr.rel (0) target = $region41
    $region40: #{regression_fcn_forward.1} parent=1 // pred_region
      _
    $region41: #{regression_fcn_forward.1} parent=1 // pred_fallthru
      _
    // Predicated region
    $region42: #{regression_fcn_forward.1} parent=1 // pred_check
      _
    $region43: #{regression_fcn_forward.1} parent=1 // pred_check_branch
      %84 = sbr.rel (0) target = $region45
    $region44: #{regression_fcn_forward.1} parent=1 // pred_region
      _
    $region45: #{regression_fcn_forward.1} parent=1 // pred_fallthru
      _
    // Predicated region
    $region46: #{regression_fcn_forward.1} parent=1 // pred_check
      _
    $region47: #{regression_fcn_forward.1} parent=1 // pred_check_branch
      %86 = sbr.rel (0) target = $region49
    $region48: #{regression_fcn_forward.1} parent=1 // pred_region
      %88 = dma.done [#allocation5], 5120
    $region49: #{regression_fcn_forward.1} parent=1 // pred_fallthru
      _
    // Predicated region
    $region50: #{regression_fcn_forward.1} parent=1 // pred_check
      _
    $region51: #{regression_fcn_forward.1} parent=1 // pred_check_branch
      %90 = sbr.rel (0) target = $region53
    $region52: #{regression_fcn_forward.1} parent=1 // pred_region
      %92 = dma.done [#allocation7], 5120
    $region53: #{regression_fcn_forward.1} parent=1 // pred_fallthru
      _
    // Predicated region
    $region54: #{regression_fcn_forward.1} parent=1 // pred_check
      _
    $region55: #{regression_fcn_forward.1} parent=1 // pred_check_branch
      %94 = sbr.rel (0) target = $region57
    $region56: #{regression_fcn_forward.1} parent=1 // pred_region
      %96 = dma.done [#allocation7], 5120
    $region57: #{regression_fcn_forward.1} parent=1 // pred_fallthru
      _
    // Predicated region
    $region58: #{regression_fcn_forward.1} parent=1 // pred_check
      _
    $region59: #{regression_fcn_forward.1} parent=1 // pred_check_branch
      %98 = sbr.rel (0) target = $region61
    $region60: #{regression_fcn_forward.1} parent=1 // pred_region
      %100 = dma.done [#allocation10], 5120
    $region61: #{regression_fcn_forward.1} parent=1 // pred_fallthru
      _
    %102 = vst [vmem:[#allocation2] sm:$0xf] 0
    %103 = vst [vmem:[#allocation2 + $0x10] sm:$0xf] 0
    %104 = vst [vmem:[#allocation2 + $0xc] sm:$0xf] 0
    %105 = vst [vmem:[#allocation2 + $0x1c] sm:$0xf] 0
    %106 = vst [vmem:[#allocation3] sm:$0xf] 0
    %107 = vst [vmem:[#allocation3 + $0x10] sm:$0xf] 0
    %108 = vst [vmem:[#allocation3 + $0xc] sm:$0xf] 0
    %109 = vst [vmem:[#allocation3 + $0x1c] sm:$0xf] 0
    %v110 = vld [vmem:[%s0] sm:$0xf]
    %v111 = vld [vmem:[%s0 + $0x4] sm:$0xf]
    %v112 = vld [vmem:[%s0 + $0x8] sm:$0xf]
    %v113 = vld [vmem:[%s0 + $0xc] sm:$0xf]
    %114 = vst [vmem:[#allocation2 + $0x4] sm:$0xf] %v110
    %115 = vst [vmem:[#allocation2 + $0x8] sm:$0xf] %v111
    %116 = vst [vmem:[#allocation2 + $0x14] sm:$0xf] %v112
    %117 = vst [vmem:[#allocation2 + $0x18] sm:$0xf] %v113
    %v118 = vld [vmem:[#allocation2] sm:$0x8]
    %v119 = vld [vmem:[#allocation2 + $0x4] sm:$0xf]
    %v120 = vld [vmem:[#allocation2 + $0x8] sm:$0x7]
    %v121 = vld [vmem:[#allocation2 + $0x10] sm:$0x8]
    %v122 = vld [vmem:[#allocation2 + $0x14] sm:$0xf]
    %v123 = vld [vmem:[#allocation2 + $0x18] sm:$0x7]
    %vm130 = vcmask 1040384
    %vm131 = vcmask 1044484
    %vm132 = vmor %vm130, %vm131
    %v133 = vrot.slane %v118, 7
    %v134 = vrot.slane %v133, 4
    %v135 = vrot.slane %v119, 7
    %v136 = vsel %vm132, %v134, %v135
    %v137 = vrot.slane %v135, 4
    %v138 = vrot.slane %v120, 7
    %v139 = vsel %vm132, %v137, %v138
    %v140 = vrot.slane %v121, 7
    %v141 = vrot.slane %v140, 4
    %v142 = vrot.slane %v122, 7
    %v143 = vsel %vm132, %v141, %v142
    %v144 = vrot.slane %v142, 4
    %v145 = vrot.slane %v123, 7
    %v146 = vsel %vm132, %v144, %v145
    %v147 = vld [vmem:[#allocation4] sm:$0xf]
    %v148 = vld [vmem:[#allocation4 + $0x4] sm:$0xf]
    %v149 = vld [vmem:[#allocation4 + $0x8] sm:$0xf]
    %v150 = vld [vmem:[#allocation4 + $0xc] sm:$0xf]
    %v151 = vld [vmem:[#allocation4 + $0x10] sm:$0xf]
    %v152 = vld [vmem:[#allocation4 + $0x14] sm:$0xf]
    %v153 = vld [vmem:[#allocation4 + $0x18] sm:$0xf]
    %v154 = vld [vmem:[#allocation4 + $0x1c] sm:$0xf]
    %v155 = vld [vmem:[#allocation4 + $0x20] sm:$0xf]
    %v156 = vld [vmem:[#allocation4 + $0x24] sm:$0xf]
    %v157 = vld [vmem:[#allocation4 + $0x28] sm:$0xf]
    %v158 = vld [vmem:[#allocation4 + $0x2c] sm:$0xf]
    %v159 = vld [vmem:[#allocation4 + $0x30] sm:$0xf]
    %v160 = vld [vmem:[#allocation4 + $0x34] sm:$0xf]
    %v161 = vld [vmem:[#allocation4 + $0x38] sm:$0xf]
    %v162 = vld [vmem:[#allocation4 + $0x3c] sm:$0xf]
    %v163 = vld [vmem:[#allocation2 + $0x8] sm:$0xf]
    %v164 = vld [vmem:[#allocation2 + $0x18] sm:$0xf]
    %vm165 = vsmask.f32 256
    %vm166 = vsmask.f32 4368
    %vm167 = vmor %vm165, %vm166
    %v169 = vshrl.u32 %v118, 16
    %v171 = vrot.slane %v169, 7
    %v172 = vrot.slane %v171, 4
    %v174 = vshrl.u32 %v119, 16
    %v176 = vrot.slane %v174, 7
    %v177 = vshll.u32 %v119, 16
    %v179 = vor.u32 %v176, %v177
    %v180 = vsel %vm167, %v172, %v179
    %v181 = vrot.slane %v176, 4
    %v183 = vshrl.u32 %v163, 16
    %v185 = vrot.slane %v183, 7
    %v186 = vshll.u32 %v163, 16
    %v188 = vor.u32 %v185, %v186
    %v189 = vsel %vm167, %v181, %v188
    %v191 = vshrl.u32 %v121, 16
    %v193 = vrot.slane %v191, 7
    %v194 = vrot.slane %v193, 4
    %v196 = vshrl.u32 %v122, 16
    %v198 = vrot.slane %v196, 7
    %v199 = vshll.u32 %v122, 16
    %v201 = vor.u32 %v198, %v199
    %v202 = vsel %vm167, %v194, %v201
    %v203 = vrot.slane %v198, 4
    %v205 = vshrl.u32 %v164, 16
    %v207 = vrot.slane %v205, 7
    %v208 = vshll.u32 %v164, 16
    %v210 = vor.u32 %v207, %v208
    %v211 = vsel %vm167, %v203, %v210
    %v212 = vld [vmem:[#allocation4 + $0x40] sm:$0xf]
    %v213 = vld [vmem:[#allocation4 + $0x44] sm:$0xf]
    %v214 = vld [vmem:[#allocation4 + $0x48] sm:$0xf]
    %v215 = vld [vmem:[#allocation4 + $0x4c] sm:$0xf]
    %v216 = vld [vmem:[#allocation4 + $0x50] sm:$0xf]
    %v217 = vld [vmem:[#allocation4 + $0x54] sm:$0xf]
    %v218 = vld [vmem:[#allocation4 + $0x58] sm:$0xf]
    %v219 = vld [vmem:[#allocation4 + $0x5c] sm:$0xf]
    %v220 = vld [vmem:[#allocation4 + $0x60] sm:$0xf]
    %v221 = vld [vmem:[#allocation4 + $0x64] sm:$0xf]
    %v222 = vld [vmem:[#allocation4 + $0x68] sm:$0xf]
    %v223 = vld [vmem:[#allocation4 + $0x6c] sm:$0xf]
    %v224 = vld [vmem:[#allocation4 + $0x70] sm:$0xf]
    %v225 = vld [vmem:[#allocation4 + $0x74] sm:$0xf]
    %v226 = vld [vmem:[#allocation4 + $0x78] sm:$0xf]
    %v227 = vld [vmem:[#allocation4 + $0x7c] sm:$0xf]
    %v228 = vunpack.c.l.b16 %v180
    %v229 = vunpack.c.l.b16 %v189
    %v230 = vunpack.c.l.b16 %v202
    %v231 = vunpack.c.l.b16 %v211
    %v232 = vpack.c.b16 %v229, %v228
    %v233 = vpack.c.b16 %v231, %v230
    %v252 = vunpack.c.l.b16 %v212
    %v253 = vunpack.c.l.b16 %v213
    %v254 = vunpack.c.l.b16 %v214
    %v255 = vunpack.c.l.b16 %v215
    %v256 = vunpack.c.l.b16 %v216
    %v257 = vunpack.c.l.b16 %v217
    %v258 = vunpack.c.l.b16 %v218
    %v259 = vunpack.c.l.b16 %v219
    %v260 = vunpack.c.l.b16 %v220
    %v261 = vunpack.c.l.b16 %v221
    %v262 = vunpack.c.l.b16 %v222
    %v263 = vunpack.c.l.b16 %v223
    %v264 = vunpack.c.l.b16 %v224
    %v265 = vunpack.c.l.b16 %v225
    %v266 = vunpack.c.l.b16 %v226
    %v267 = vunpack.c.l.b16 %v227
    %v268 = vpack.c.b16 %v253, %v252
    %v269 = vpack.c.b16 %v255, %v254
    %v270 = vpack.c.b16 %v257, %v256
    %v271 = vpack.c.b16 %v259, %v258
    %v272 = vpack.c.b16 %v261, %v260
    %v273 = vpack.c.b16 %v263, %v262
    %v274 = vpack.c.b16 %v265, %v264
    %v275 = vpack.c.b16 %v267, %v266
    %284 = vmatpush.bf16.msra.mxu0 %v275
    %285 = vmatpush.bf16.msra.mxu0 %v274
    %286 = vmatpush.bf16.msra.mxu0 %v273
    %287 = vmatpush.bf16.msra.mxu0 %v272
    %288 = vmatpush.bf16.msra.mxu0 %v271
    %289 = vmatpush.bf16.msra.mxu0 %v270
    %290 = vmatpush.bf16.msra.mxu0 %v269
    %291 = vmatpush.bf16.msra.mxu0 %v268
    %292 = vmatmul.bf16.gmra.mxu0 %v232
    %v293 = vpop.f32.mrf.mxu0
    %v294 = vadd.f32 0.0, %v293
    %v295 = vpop.f32.mrf.mxu0
    %v296 = vadd.f32 0.0, %v295
    %297 = vmatmul.bf16.gmra.mxu0 %v233
    %v298 = vpop.f32.mrf.mxu0
    %v299 = vadd.f32 0.0, %v298
    %v300 = vpop.f32.mrf.mxu0
    %v301 = vadd.f32 0.0, %v300
    %302 = vdwg.mxu0
    %v303 = vunpack.c.l.b16 %v136
    %v304 = vunpack.c.l.b16 %v139
    %v305 = vunpack.c.l.b16 %v143
    %v306 = vunpack.c.l.b16 %v146
    %v307 = vpack.c.b16 %v304, %v303
    %v308 = vpack.c.b16 %v306, %v305
    %v327 = vunpack.c.l.b16 %v147
    %v328 = vunpack.c.l.b16 %v148
    %v329 = vunpack.c.l.b16 %v149
    %v330 = vunpack.c.l.b16 %v150
    %v331 = vunpack.c.l.b16 %v151
    %v332 = vunpack.c.l.b16 %v152
    %v333 = vunpack.c.l.b16 %v153
    %v334 = vunpack.c.l.b16 %v154
    %v335 = vunpack.c.l.b16 %v155
    %v336 = vunpack.c.l.b16 %v156
    %v337 = vunpack.c.l.b16 %v157
    %v338 = vunpack.c.l.b16 %v158
    %v339 = vunpack.c.l.b16 %v159
    %v340 = vunpack.c.l.b16 %v160
    %v341 = vunpack.c.l.b16 %v161
    %v342 = vunpack.c.l.b16 %v162
    %v343 = vpack.c.b16 %v328, %v327
    %v344 = vpack.c.b16 %v330, %v329
    %v345 = vpack.c.b16 %v332, %v331
    %v346 = vpack.c.b16 %v334, %v333
    %v347 = vpack.c.b16 %v336, %v335
    %v348 = vpack.c.b16 %v338, %v337
    %v349 = vpack.c.b16 %v340, %v339
    %v350 = vpack.c.b16 %v342, %v341
    %359 = vmatpush.bf16.msra.mxu0 %v350
    %360 = vmatpush.bf16.msra.mxu0 %v349
    %361 = vmatpush.bf16.msra.mxu0 %v348
    %362 = vmatpush.bf16.msra.mxu0 %v347
    %363 = vmatpush.bf16.msra.mxu0 %v346
    %364 = vmatpush.bf16.msra.mxu0 %v345
    %365 = vmatpush.bf16.msra.mxu0 %v344
    %366 = vmatpush.bf16.msra.mxu0 %v343
    %367 = vmatmul.bf16.gmra.mxu0 %v307
    %v368 = vpop.f32.mrf.mxu0
    %v369 = vadd.f32 %v294, %v368
    %v370 = vpop.f32.mrf.mxu0
    %v371 = vadd.f32 %v296, %v370
    %372 = vmatmul.bf16.gmra.mxu0 %v308
    %v373 = vpop.f32.mrf.mxu0
    %v374 = vadd.f32 %v299, %v373
    %v375 = vpop.f32.mrf.mxu0
    %v376 = vadd.f32 %v301, %v375
    %377 = vdwg.mxu0
    %v378 = vld [vmem:[#allocation4 + $0x80] sm:$0xf]
    %v379 = vld [vmem:[#allocation4 + $0x84] sm:$0xf]
    %v380 = vld [vmem:[#allocation4 + $0x88] sm:$0xf]
    %v381 = vld [vmem:[#allocation4 + $0x8c] sm:$0xf]
    %v382 = vld [vmem:[#allocation4 + $0x90] sm:$0xf]
    %v383 = vld [vmem:[#allocation4 + $0x94] sm:$0xf]
    %v384 = vld [vmem:[#allocation4 + $0x98] sm:$0xf]
    %v385 = vld [vmem:[#allocation4 + $0x9c] sm:$0xf]
    %v386 = vld [vmem:[#allocation4 + $0xa0] sm:$0xf]
    %v387 = vld [vmem:[#allocation4 + $0xa4] sm:$0xf]
    %v388 = vld [vmem:[#allocation4 + $0xa8] sm:$0xf]
    %v389 = vld [vmem:[#allocation4 + $0xac] sm:$0xf]
    %v390 = vld [vmem:[#allocation4 + $0xb0] sm:$0xf]
    %v391 = vld [vmem:[#allocation4 + $0xb4] sm:$0xf]
    %v392 = vld [vmem:[#allocation4 + $0xb8] sm:$0xf]
    %v393 = vld [vmem:[#allocation4 + $0xbc] sm:$0xf]
    %v396 = vunpack.c.l.b16 %v119
    %v397 = vunpack.c.l.b16 %v163
    %v398 = vunpack.c.l.b16 %v122
    %v399 = vunpack.c.l.b16 %v164
    %v400 = vpack.c.b16 %v397, %v396
    %v401 = vpack.c.b16 %v399, %v398
    %v420 = vunpack.c.l.b16 %v378
    %v421 = vunpack.c.l.b16 %v379
    %v422 = vunpack.c.l.b16 %v380
    %v423 = vunpack.c.l.b16 %v381
    %v424 = vunpack.c.l.b16 %v382
    %v425 = vunpack.c.l.b16 %v383
    %v426 = vunpack.c.l.b16 %v384
    %v427 = vunpack.c.l.b16 %v385
    %v428 = vunpack.c.l.b16 %v386
    %v429 = vunpack.c.l.b16 %v387
    %v430 = vunpack.c.l.b16 %v388
    %v431 = vunpack.c.l.b16 %v389
    %v432 = vunpack.c.l.b16 %v390
    %v433 = vunpack.c.l.b16 %v391
    %v434 = vunpack.c.l.b16 %v392
    %v435 = vunpack.c.l.b16 %v393
    %v436 = vpack.c.b16 %v421, %v420
    %v437 = vpack.c.b16 %v423, %v422
    %v438 = vpack.c.b16 %v425, %v424
    %v439 = vpack.c.b16 %v427, %v426
    %v440 = vpack.c.b16 %v429, %v428
    %v441 = vpack.c.b16 %v431, %v430
    %v442 = vpack.c.b16 %v433, %v432
    %v443 = vpack.c.b16 %v435, %v434
    %452 = vmatpush.bf16.msra.mxu0 %v443
    %453 = vmatpush.bf16.msra.mxu0 %v442
    %454 = vmatpush.bf16.msra.mxu0 %v441
    %455 = vmatpush.bf16.msra.mxu0 %v440
    %456 = vmatpush.bf16.msra.mxu0 %v439
    %457 = vmatpush.bf16.msra.mxu0 %v438
    %458 = vmatpush.bf16.msra.mxu0 %v437
    %459 = vmatpush.bf16.msra.mxu0 %v436
    %460 = vmatmul.bf16.gmra.mxu0 %v400
    %v461 = vpop.f32.mrf.mxu0
    %v462 = vadd.f32 0.0, %v461
    %v463 = vpop.f32.mrf.mxu0
    %v464 = vadd.f32 0.0, %v463
    %465 = vmatmul.bf16.gmra.mxu0 %v401
    %v466 = vpop.f32.mrf.mxu0
    %v467 = vadd.f32 0.0, %v466
    %v468 = vpop.f32.mrf.mxu0
    %v469 = vadd.f32 0.0, %v468
    %470 = vdwg.mxu0
    %v471 = vadd.f32 %v369, %v462
    %v472 = vadd.f32 %v371, %v464
    %v473 = vadd.f32 %v374, %v467
    %v474 = vadd.f32 %v376, %v469
    %v475 = vld [vmem:[#allocation2 + $0x4] sm:$0xf]
    %v476 = vld [vmem:[#allocation2 + $0x8] sm:$0xf]
    %v477 = vld [vmem:[#allocation2 + $0xc] sm:$0x1]
    %v478 = vld [vmem:[#allocation2 + $0x14] sm:$0xf]
    %v479 = vld [vmem:[#allocation2 + $0x18] sm:$0xf]
    %v480 = vld [vmem:[#allocation2 + $0x1c] sm:$0x1]
    %vm481 = vsmask.f32 3328
    %vm482 = vsmask.f32 7440
    %vm483 = vmor %vm481, %vm482
    %v485 = vshrl.u32 %v475, 16
    %v487 = vrot.slane %v485, 4
    %v488 = vshll.u32 %v475, 16
    %v490 = vrot.slane %v488, 5
    %v491 = vor.u32 %v487, %v490
    %v492 = vrot.slane %v491, 4
    %v494 = vshll.u32 %v476, 16
    %v496 = vrot.slane %v494, 5
    %v497 = vsel %vm483, %v492, %v496
    %v498 = vshrl.u32 %v476, 16
    %v500 = vrot.slane %v498, 4
    %v501 = vor.u32 %v500, %v496
    %v502 = vrot.slane %v501, 4
    %v504 = vshll.u32 %v477, 16
    %v506 = vrot.slane %v504, 5
    %v507 = vsel %vm483, %v502, %v506
    %v509 = vshrl.u32 %v478, 16
    %v511 = vrot.slane %v509, 4
    %v512 = vshll.u32 %v478, 16
    %v514 = vrot.slane %v512, 5
    %v515 = vor.u32 %v511, %v514
    %v516 = vrot.slane %v515, 4
    %v518 = vshll.u32 %v479, 16
    %v520 = vrot.slane %v518, 5
    %v521 = vsel %vm483, %v516, %v520
    %v522 = vshrl.u32 %v479, 16
    %v524 = vrot.slane %v522, 4
    %v525 = vor.u32 %v524, %v520
    %v526 = vrot.slane %v525, 4
    %v528 = vshll.u32 %v480, 16
    %v530 = vrot.slane %v528, 5
    %v531 = vsel %vm483, %v526, %v530
    %v532 = vld [vmem:[#allocation4 + $0xc0] sm:$0xf]
    %v533 = vld [vmem:[#allocation4 + $0xc4] sm:$0xf]
    %v534 = vld [vmem:[#allocation4 + $0xc8] sm:$0xf]
    %v535 = vld [vmem:[#allocation4 + $0xcc] sm:$0xf]
    %v536 = vld [vmem:[#allocation4 + $0xd0] sm:$0xf]
    %v537 = vld [vmem:[#allocation4 + $0xd4] sm:$0xf]
    %v538 = vld [vmem:[#allocation4 + $0xd8] sm:$0xf]
    %v539 = vld [vmem:[#allocation4 + $0xdc] sm:$0xf]
    %v540 = vld [vmem:[#allocation4 + $0xe0] sm:$0xf]
    %v541 = vld [vmem:[#allocation4 + $0xe4] sm:$0xf]
    %v542 = vld [vmem:[#allocation4 + $0xe8] sm:$0xf]
    %v543 = vld [vmem:[#allocation4 + $0xec] sm:$0xf]
    %v544 = vld [vmem:[#allocation4 + $0xf0] sm:$0xf]
    %v545 = vld [vmem:[#allocation4 + $0xf4] sm:$0xf]
    %v546 = vld [vmem:[#allocation4 + $0xf8] sm:$0xf]
    %v547 = vld [vmem:[#allocation4 + $0xfc] sm:$0xf]
    %v548 = vunpack.c.l.b16 %v497
    %v549 = vunpack.c.l.b16 %v507
    %v550 = vunpack.c.l.b16 %v521
    %v551 = vunpack.c.l.b16 %v531
    %v552 = vpack.c.b16 %v549, %v548
    %v553 = vpack.c.b16 %v551, %v550
    %v572 = vunpack.c.l.b16 %v532
    %v573 = vunpack.c.l.b16 %v533
    %v574 = vunpack.c.l.b16 %v534
    %v575 = vunpack.c.l.b16 %v535
    %v576 = vunpack.c.l.b16 %v536
    %v577 = vunpack.c.l.b16 %v537
    %v578 = vunpack.c.l.b16 %v538
    %v579 = vunpack.c.l.b16 %v539
    %v580 = vunpack.c.l.b16 %v540
    %v581 = vunpack.c.l.b16 %v541
    %v582 = vunpack.c.l.b16 %v542
    %v583 = vunpack.c.l.b16 %v543
    %v584 = vunpack.c.l.b16 %v544
    %v585 = vunpack.c.l.b16 %v545
    %v586 = vunpack.c.l.b16 %v546
    %v587 = vunpack.c.l.b16 %v547
    %v588 = vpack.c.b16 %v573, %v572
    %v589 = vpack.c.b16 %v575, %v574
    %v590 = vpack.c.b16 %v577, %v576
    %v591 = vpack.c.b16 %v579, %v578
    %v592 = vpack.c.b16 %v581, %v580
    %v593 = vpack.c.b16 %v583, %v582
    %v594 = vpack.c.b16 %v585, %v584
    %v595 = vpack.c.b16 %v587, %v586
    %604 = vmatpush.bf16.msra.mxu0 %v595
    %605 = vmatpush.bf16.msra.mxu0 %v594
    %606 = vmatpush.bf16.msra.mxu0 %v593
    %607 = vmatpush.bf16.msra.mxu0 %v592
    %608 = vmatpush.bf16.msra.mxu0 %v591
    %609 = vmatpush.bf16.msra.mxu0 %v590
    %610 = vmatpush.bf16.msra.mxu0 %v589
    %611 = vmatpush.bf16.msra.mxu0 %v588
    %612 = vmatmul.bf16.gmra.mxu0 %v552
    %v613 = vpop.f32.mrf.mxu0
    %v614 = vadd.f32 0.0, %v613
    %v615 = vpop.f32.mrf.mxu0
    %v616 = vadd.f32 0.0, %v615
    %617 = vmatmul.bf16.gmra.mxu0 %v553
    %v618 = vpop.f32.mrf.mxu0
    %v619 = vadd.f32 0.0, %v618
    %v620 = vpop.f32.mrf.mxu0
    %v621 = vadd.f32 0.0, %v620
    %622 = vdwg.mxu0
    %v623 = vadd.f32 %v471, %v614
    %v624 = vadd.f32 %v472, %v616
    %v625 = vadd.f32 %v473, %v619
    %v626 = vadd.f32 %v474, %v621
    %v627 = vld [vmem:[#allocation2 + $0x4] sm:$0xe]
    %v628 = vld [vmem:[#allocation2 + $0x14] sm:$0xe]
    %vm635 = vcmask 1042432
    %vm636 = vcmask 1046532
    %vm637 = vmor %vm635, %vm636
    %v638 = vrot.slane %v627, 5
    %v639 = vrot.slane %v638, 4
    %v640 = vrot.slane %v476, 5
    %v641 = vsel %vm637, %v639, %v640
    %v642 = vrot.slane %v640, 4
    %v643 = vrot.slane %v477, 5
    %v644 = vsel %vm637, %v642, %v643
    %v645 = vrot.slane %v628, 5
    %v646 = vrot.slane %v645, 4
    %v647 = vrot.slane %v479, 5
    %v648 = vsel %vm637, %v646, %v647
    %v649 = vrot.slane %v647, 4
    %v650 = vrot.slane %v480, 5
    %v651 = vsel %vm637, %v649, %v650
    %v652 = vld [vmem:[#allocation4 + $0x100] sm:$0xf]
    %v653 = vld [vmem:[#allocation4 + $0x104] sm:$0xf]
    %v654 = vld [vmem:[#allocation4 + $0x108] sm:$0xf]
    %v655 = vld [vmem:[#allocation4 + $0x10c] sm:$0xf]
    %v656 = vld [vmem:[#allocation4 + $0x110] sm:$0xf]
    %v657 = vld [vmem:[#allocation4 + $0x114] sm:$0xf]
    %v658 = vld [vmem:[#allocation4 + $0x118] sm:$0xf]
    %v659 = vld [vmem:[#allocation4 + $0x11c] sm:$0xf]
    %v660 = vld [vmem:[#allocation4 + $0x120] sm:$0xf]
    %v661 = vld [vmem:[#allocation4 + $0x124] sm:$0xf]
    %v662 = vld [vmem:[#allocation4 + $0x128] sm:$0xf]
    %v663 = vld [vmem:[#allocation4 + $0x12c] sm:$0xf]
    %v664 = vld [vmem:[#allocation4 + $0x130] sm:$0xf]
    %v665 = vld [vmem:[#allocation4 + $0x134] sm:$0xf]
    %v666 = vld [vmem:[#allocation4 + $0x138] sm:$0xf]
    %v667 = vld [vmem:[#allocation4 + $0x13c] sm:$0xf]
    %v668 = vunpack.c.l.b16 %v641
    %v669 = vunpack.c.l.b16 %v644
    %v670 = vunpack.c.l.b16 %v648
    %v671 = vunpack.c.l.b16 %v651
    %v672 = vpack.c.b16 %v669, %v668
    %v673 = vpack.c.b16 %v671, %v670
    %v692 = vunpack.c.l.b16 %v652
    %v693 = vunpack.c.l.b16 %v653
    %v694 = vunpack.c.l.b16 %v654
    %v695 = vunpack.c.l.b16 %v655
    %v696 = vunpack.c.l.b16 %v656
    %v697 = vunpack.c.l.b16 %v657
    %v698 = vunpack.c.l.b16 %v658
    %v699 = vunpack.c.l.b16 %v659
    %v700 = vunpack.c.l.b16 %v660
    %v701 = vunpack.c.l.b16 %v661
    %v702 = vunpack.c.l.b16 %v662
    %v703 = vunpack.c.l.b16 %v663
    %v704 = vunpack.c.l.b16 %v664
    %v705 = vunpack.c.l.b16 %v665
    %v706 = vunpack.c.l.b16 %v666
    %v707 = vunpack.c.l.b16 %v667
    %v708 = vpack.c.b16 %v693, %v692
    %v709 = vpack.c.b16 %v695, %v694
    %v710 = vpack.c.b16 %v697, %v696
    %v711 = vpack.c.b16 %v699, %v698
    %v712 = vpack.c.b16 %v701, %v700
    %v713 = vpack.c.b16 %v703, %v702
    %v714 = vpack.c.b16 %v705, %v704
    %v715 = vpack.c.b16 %v707, %v706
    %724 = vmatpush.bf16.msra.mxu0 %v715
    %725 = vmatpush.bf16.msra.mxu0 %v714
    %726 = vmatpush.bf16.msra.mxu0 %v713
    %727 = vmatpush.bf16.msra.mxu0 %v712
    %728 = vmatpush.bf16.msra.mxu0 %v711
    %729 = vmatpush.bf16.msra.mxu0 %v710
    %730 = vmatpush.bf16.msra.mxu0 %v709
    %731 = vmatpush.bf16.msra.mxu0 %v708
    %732 = vmatmul.bf16.gmra.mxu0 %v672
    %v733 = vpop.f32.mrf.mxu0
    %v734 = vadd.f32 0.0, %v733
    %v735 = vpop.f32.mrf.mxu0
    %v736 = vadd.f32 0.0, %v735
    %737 = vmatmul.bf16.gmra.mxu0 %v673
    %v738 = vpop.f32.mrf.mxu0
    %v739 = vadd.f32 0.0, %v738
    %v740 = vpop.f32.mrf.mxu0
    %v741 = vadd.f32 0.0, %v740
    %742 = vdwg.mxu0
    %v743 = vadd.f32 %v623, %v734
    %v744 = vadd.f32 %v624, %v736
    %v745 = vadd.f32 %v625, %v739
    %v746 = vadd.f32 %v626, %v741
    %v747 = vld [vmem:[%s2] sm:$0x1]
    %v749 = vperm.slane %v747, 0
    %v751 = vadd.f32 %v743, %v749
    %v752 = vadd.f32 %v744, %v749
    %v753 = vadd.f32 %v745, %v749
    %v754 = vadd.f32 %v746, %v749
    %v755 = vmax.f32 %v751, 0.0
    %v756 = vmax.f32 %v752, 0.0
    %v757 = vmax.f32 %v753, 0.0
    %v758 = vmax.f32 %v754, 0.0
    %v759 = vpack.c.bf16 %v755, %v755
    %v760 = vpack.c.bf16 %v756, %v756
    %v761 = vpack.c.bf16 %v757, %v757
    %v762 = vpack.c.bf16 %v758, %v758
    %763 = vst [vmem:[#allocation3 + $0x4] sm:$0xf] %v759
    %764 = vst [vmem:[#allocation3 + $0x8] sm:$0xf] %v760
    %765 = vst [vmem:[#allocation3 + $0x14] sm:$0xf] %v761
    %766 = vst [vmem:[#allocation3 + $0x18] sm:$0xf] %v762
    %v767 = vld [vmem:[#allocation3] sm:$0x8]
    %v768 = vld [vmem:[#allocation3 + $0x4] sm:$0xf]
    %v769 = vld [vmem:[#allocation3 + $0x8] sm:$0x7]
    %v770 = vld [vmem:[#allocation3 + $0x10] sm:$0x8]
    %v771 = vld [vmem:[#allocation3 + $0x14] sm:$0xf]
    %v772 = vld [vmem:[#allocation3 + $0x18] sm:$0x7]
    %v779 = vrot.slane %v767, 7
    %v780 = vrot.slane %v779, 4
    %v781 = vrot.slane %v768, 7
    %v782 = vsel %vm132, %v780, %v781
    %v783 = vrot.slane %v781, 4
    %v784 = vrot.slane %v769, 7
    %v785 = vsel %vm132, %v783, %v784
    %v786 = vrot.slane %v770, 7
    %v787 = vrot.slane %v786, 4
    %v788 = vrot.slane %v771, 7
    %v789 = vsel %vm132, %v787, %v788
    %v790 = vrot.slane %v788, 4
    %v791 = vrot.slane %v772, 7
    %v792 = vsel %vm132, %v790, %v791
    %v793 = vld [vmem:[#allocation6] sm:$0xf]
    %v794 = vld [vmem:[#allocation6 + $0x4] sm:$0xf]
    %v795 = vld [vmem:[#allocation6 + $0x8] sm:$0xf]
    %v796 = vld [vmem:[#allocation6 + $0xc] sm:$0xf]
    %v797 = vld [vmem:[#allocation6 + $0x10] sm:$0xf]
    %v798 = vld [vmem:[#allocation6 + $0x14] sm:$0xf]
    %v799 = vld [vmem:[#allocation6 + $0x18] sm:$0xf]
    %v800 = vld [vmem:[#allocation6 + $0x1c] sm:$0xf]
    %v801 = vld [vmem:[#allocation6 + $0x20] sm:$0xf]
    %v802 = vld [vmem:[#allocation6 + $0x24] sm:$0xf]
    %v803 = vld [vmem:[#allocation6 + $0x28] sm:$0xf]
    %v804 = vld [vmem:[#allocation6 + $0x2c] sm:$0xf]
    %v805 = vld [vmem:[#allocation6 + $0x30] sm:$0xf]
    %v806 = vld [vmem:[#allocation6 + $0x34] sm:$0xf]
    %v807 = vld [vmem:[#allocation6 + $0x38] sm:$0xf]
    %v808 = vld [vmem:[#allocation6 + $0x3c] sm:$0xf]
    %v809 = vld [vmem:[#allocation3 + $0x8] sm:$0xf]
    %v810 = vld [vmem:[#allocation3 + $0x18] sm:$0xf]
    %v812 = vshrl.u32 %v767, 16
    %v814 = vrot.slane %v812, 7
    %v815 = vrot.slane %v814, 4
    %v817 = vshrl.u32 %v768, 16
    %v819 = vrot.slane %v817, 7
    %v820 = vshll.u32 %v768, 16
    %v822 = vor.u32 %v819, %v820
    %v823 = vsel %vm167, %v815, %v822
    %v824 = vrot.slane %v819, 4
    %v826 = vshrl.u32 %v809, 16
    %v828 = vrot.slane %v826, 7
    %v829 = vshll.u32 %v809, 16
    %v831 = vor.u32 %v828, %v829
    %v832 = vsel %vm167, %v824, %v831
    %v834 = vshrl.u32 %v770, 16
    %v836 = vrot.slane %v834, 7
    %v837 = vrot.slane %v836, 4
    %v839 = vshrl.u32 %v771, 16
    %v841 = vrot.slane %v839, 7
    %v842 = vshll.u32 %v771, 16
    %v844 = vor.u32 %v841, %v842
    %v845 = vsel %vm167, %v837, %v844
    %v846 = vrot.slane %v841, 4
    %v848 = vshrl.u32 %v810, 16
    %v850 = vrot.slane %v848, 7
    %v851 = vshll.u32 %v810, 16
    %v853 = vor.u32 %v850, %v851
    %v854 = vsel %vm167, %v846, %v853
    %v855 = vld [vmem:[#allocation6 + $0x40] sm:$0xf]
    %v856 = vld [vmem:[#allocation6 + $0x44] sm:$0xf]
    %v857 = vld [vmem:[#allocation6 + $0x48] sm:$0xf]
    %v858 = vld [vmem:[#allocation6 + $0x4c] sm:$0xf]
    %v859 = vld [vmem:[#allocation6 + $0x50] sm:$0xf]
    %v860 = vld [vmem:[#allocation6 + $0x54] sm:$0xf]
    %v861 = vld [vmem:[#allocation6 + $0x58] sm:$0xf]
    %v862 = vld [vmem:[#allocation6 + $0x5c] sm:$0xf]
    %v863 = vld [vmem:[#allocation6 + $0x60] sm:$0xf]
    %v864 = vld [vmem:[#allocation6 + $0x64] sm:$0xf]
    %v865 = vld [vmem:[#allocation6 + $0x68] sm:$0xf]
    %v866 = vld [vmem:[#allocation6 + $0x6c] sm:$0xf]
    %v867 = vld [vmem:[#allocation6 + $0x70] sm:$0xf]
    %v868 = vld [vmem:[#allocation6 + $0x74] sm:$0xf]
    %v869 = vld [vmem:[#allocation6 + $0x78] sm:$0xf]
    %v870 = vld [vmem:[#allocation6 + $0x7c] sm:$0xf]
    %v871 = vunpack.c.l.b16 %v823
    %v872 = vunpack.c.l.b16 %v832
    %v873 = vunpack.c.l.b16 %v845
    %v874 = vunpack.c.l.b16 %v854
    %v875 = vpack.c.b16 %v872, %v871
    %v876 = vpack.c.b16 %v874, %v873
    %v895 = vunpack.c.l.b16 %v855
    %v896 = vunpack.c.l.b16 %v856
    %v897 = vunpack.c.l.b16 %v857
    %v898 = vunpack.c.l.b16 %v858
    %v899 = vunpack.c.l.b16 %v859
    %v900 = vunpack.c.l.b16 %v860
    %v901 = vunpack.c.l.b16 %v861
    %v902 = vunpack.c.l.b16 %v862
    %v903 = vunpack.c.l.b16 %v863
    %v904 = vunpack.c.l.b16 %v864
    %v905 = vunpack.c.l.b16 %v865
    %v906 = vunpack.c.l.b16 %v866
    %v907 = vunpack.c.l.b16 %v867
    %v908 = vunpack.c.l.b16 %v868
    %v909 = vunpack.c.l.b16 %v869
    %v910 = vunpack.c.l.b16 %v870
    %v911 = vpack.c.b16 %v896, %v895
    %v912 = vpack.c.b16 %v898, %v897
    %v913 = vpack.c.b16 %v900, %v899
    %v914 = vpack.c.b16 %v902, %v901
    %v915 = vpack.c.b16 %v904, %v903
    %v916 = vpack.c.b16 %v906, %v905
    %v917 = vpack.c.b16 %v908, %v907
    %v918 = vpack.c.b16 %v910, %v909
    %927 = vmatpush.bf16.msra.mxu0 %v918
    %928 = vmatpush.bf16.msra.mxu0 %v917
    %929 = vmatpush.bf16.msra.mxu0 %v916
    %930 = vmatpush.bf16.msra.mxu0 %v915
    %931 = vmatpush.bf16.msra.mxu0 %v914
    %932 = vmatpush.bf16.msra.mxu0 %v913
    %933 = vmatpush.bf16.msra.mxu0 %v912
    %934 = vmatpush.bf16.msra.mxu0 %v911
    %935 = vmatmul.bf16.gmra.mxu0 %v875
    %v936 = vpop.f32.mrf.mxu0
    %v937 = vadd.f32 0.0, %v936
    %v938 = vpop.f32.mrf.mxu0
    %v939 = vadd.f32 0.0, %v938
    %940 = vmatmul.bf16.gmra.mxu0 %v876
    %v941 = vpop.f32.mrf.mxu0
    %v942 = vadd.f32 0.0, %v941
    %v943 = vpop.f32.mrf.mxu0
    %v944 = vadd.f32 0.0, %v943
    %945 = vdwg.mxu0
    %v946 = vunpack.c.l.b16 %v782
    %v947 = vunpack.c.l.b16 %v785
    %v948 = vunpack.c.l.b16 %v789
    %v949 = vunpack.c.l.b16 %v792
    %v950 = vpack.c.b16 %v947, %v946
    %v951 = vpack.c.b16 %v949, %v948
    %v970 = vunpack.c.l.b16 %v793
    %v971 = vunpack.c.l.b16 %v794
    %v972 = vunpack.c.l.b16 %v795
    %v973 = vunpack.c.l.b16 %v796
    %v974 = vunpack.c.l.b16 %v797
    %v975 = vunpack.c.l.b16 %v798
    %v976 = vunpack.c.l.b16 %v799
    %v977 = vunpack.c.l.b16 %v800
    %v978 = vunpack.c.l.b16 %v801
    %v979 = vunpack.c.l.b16 %v802
    %v980 = vunpack.c.l.b16 %v803
    %v981 = vunpack.c.l.b16 %v804
    %v982 = vunpack.c.l.b16 %v805
    %v983 = vunpack.c.l.b16 %v806
    %v984 = vunpack.c.l.b16 %v807
    %v985 = vunpack.c.l.b16 %v808
    %v986 = vpack.c.b16 %v971, %v970
    %v987 = vpack.c.b16 %v973, %v972
    %v988 = vpack.c.b16 %v975, %v974
    %v989 = vpack.c.b16 %v977, %v976
    %v990 = vpack.c.b16 %v979, %v978
    %v991 = vpack.c.b16 %v981, %v980
    %v992 = vpack.c.b16 %v983, %v982
    %v993 = vpack.c.b16 %v985, %v984
    %1002 = vmatpush.bf16.msra.mxu0 %v993
    %1003 = vmatpush.bf16.msra.mxu0 %v992
    %1004 = vmatpush.bf16.msra.mxu0 %v991
    %1005 = vmatpush.bf16.msra.mxu0 %v990
    %1006 = vmatpush.bf16.msra.mxu0 %v989
    %1007 = vmatpush.bf16.msra.mxu0 %v988
    %1008 = vmatpush.bf16.msra.mxu0 %v987
    %1009 = vmatpush.bf16.msra.mxu0 %v986
    %1010 = vmatmul.bf16.gmra.mxu0 %v950
    %v1011 = vpop.f32.mrf.mxu0
    %v1012 = vadd.f32 %v937, %v1011
    %v1013 = vpop.f32.mrf.mxu0
    %v1014 = vadd.f32 %v939, %v1013
    %1015 = vmatmul.bf16.gmra.mxu0 %v951
    %v1016 = vpop.f32.mrf.mxu0
    %v1017 = vadd.f32 %v942, %v1016
    %v1018 = vpop.f32.mrf.mxu0
    %v1019 = vadd.f32 %v944, %v1018
    %1020 = vdwg.mxu0
    %v1021 = vld [vmem:[#allocation6 + $0x80] sm:$0xf]
    %v1022 = vld [vmem:[#allocation6 + $0x84] sm:$0xf]
    %v1023 = vld [vmem:[#allocation6 + $0x88] sm:$0xf]
    %v1024 = vld [vmem:[#allocation6 + $0x8c] sm:$0xf]
    %v1025 = vld [vmem:[#allocation6 + $0x90] sm:$0xf]
    %v1026 = vld [vmem:[#allocation6 + $0x94] sm:$0xf]
    %v1027 = vld [vmem:[#allocation6 + $0x98] sm:$0xf]
    %v1028 = vld [vmem:[#allocation6 + $0x9c] sm:$0xf]
    %v1029 = vld [vmem:[#allocation6 + $0xa0] sm:$0xf]
    %v1030 = vld [vmem:[#allocation6 + $0xa4] sm:$0xf]
    %v1031 = vld [vmem:[#allocation6 + $0xa8] sm:$0xf]
    %v1032 = vld [vmem:[#allocation6 + $0xac] sm:$0xf]
    %v1033 = vld [vmem:[#allocation6 + $0xb0] sm:$0xf]
    %v1034 = vld [vmem:[#allocation6 + $0xb4] sm:$0xf]
    %v1035 = vld [vmem:[#allocation6 + $0xb8] sm:$0xf]
    %v1036 = vld [vmem:[#allocation6 + $0xbc] sm:$0xf]
    %v1039 = vunpack.c.l.b16 %v768
    %v1040 = vunpack.c.l.b16 %v809
    %v1041 = vunpack.c.l.b16 %v771
    %v1042 = vunpack.c.l.b16 %v810
    %v1043 = vpack.c.b16 %v1040, %v1039
    %v1044 = vpack.c.b16 %v1042, %v1041
    %v1063 = vunpack.c.l.b16 %v1021
    %v1064 = vunpack.c.l.b16 %v1022
    %v1065 = vunpack.c.l.b16 %v1023
    %v1066 = vunpack.c.l.b16 %v1024
    %v1067 = vunpack.c.l.b16 %v1025
    %v1068 = vunpack.c.l.b16 %v1026
    %v1069 = vunpack.c.l.b16 %v1027
    %v1070 = vunpack.c.l.b16 %v1028
    %v1071 = vunpack.c.l.b16 %v1029
    %v1072 = vunpack.c.l.b16 %v1030
    %v1073 = vunpack.c.l.b16 %v1031
    %v1074 = vunpack.c.l.b16 %v1032
    %v1075 = vunpack.c.l.b16 %v1033
    %v1076 = vunpack.c.l.b16 %v1034
    %v1077 = vunpack.c.l.b16 %v1035
    %v1078 = vunpack.c.l.b16 %v1036
    %v1079 = vpack.c.b16 %v1064, %v1063
    %v1080 = vpack.c.b16 %v1066, %v1065
    %v1081 = vpack.c.b16 %v1068, %v1067
    %v1082 = vpack.c.b16 %v1070, %v1069
    %v1083 = vpack.c.b16 %v1072, %v1071
    %v1084 = vpack.c.b16 %v1074, %v1073
    %v1085 = vpack.c.b16 %v1076, %v1075
    %v1086 = vpack.c.b16 %v1078, %v1077
    %1095 = vmatpush.bf16.msra.mxu0 %v1086
    %1096 = vmatpush.bf16.msra.mxu0 %v1085
    %1097 = vmatpush.bf16.msra.mxu0 %v1084
    %1098 = vmatpush.bf16.msra.mxu0 %v1083
    %1099 = vmatpush.bf16.msra.mxu0 %v1082
    %1100 = vmatpush.bf16.msra.mxu0 %v1081
    %1101 = vmatpush.bf16.msra.mxu0 %v1080
    %1102 = vmatpush.bf16.msra.mxu0 %v1079
    %1103 = vmatmul.bf16.gmra.mxu0 %v1043
    %v1104 = vpop.f32.mrf.mxu0
    %v1105 = vadd.f32 0.0, %v1104
    %v1106 = vpop.f32.mrf.mxu0
    %v1107 = vadd.f32 0.0, %v1106
    %1108 = vmatmul.bf16.gmra.mxu0 %v1044
    %v1109 = vpop.f32.mrf.mxu0
    %v1110 = vadd.f32 0.0, %v1109
    %v1111 = vpop.f32.mrf.mxu0
    %v1112 = vadd.f32 0.0, %v1111
    %1113 = vdwg.mxu0
    %v1114 = vadd.f32 %v1012, %v1105
    %v1115 = vadd.f32 %v1014, %v1107
    %v1116 = vadd.f32 %v1017, %v1110
    %v1117 = vadd.f32 %v1019, %v1112
    %v1118 = vld [vmem:[#allocation3 + $0x4] sm:$0xf]
    %v1119 = vld [vmem:[#allocation3 + $0x8] sm:$0xf]
    %v1120 = vld [vmem:[#allocation3 + $0xc] sm:$0x1]
    %v1121 = vld [vmem:[#allocation3 + $0x14] sm:$0xf]
    %v1122 = vld [vmem:[#allocation3 + $0x18] sm:$0xf]
    %v1123 = vld [vmem:[#allocation3 + $0x1c] sm:$0x1]
    %v1125 = vshrl.u32 %v1118, 16
    %v1127 = vrot.slane %v1125, 4
    %v1128 = vshll.u32 %v1118, 16
    %v1130 = vrot.slane %v1128, 5
    %v1131 = vor.u32 %v1127, %v1130
    %v1132 = vrot.slane %v1131, 4
    %v1134 = vshll.u32 %v1119, 16
    %v1136 = vrot.slane %v1134, 5
    %v1137 = vsel %vm483, %v1132, %v1136
    %v1138 = vshrl.u32 %v1119, 16
    %v1140 = vrot.slane %v1138, 4
    %v1141 = vor.u32 %v1140, %v1136
    %v1142 = vrot.slane %v1141, 4
    %v1144 = vshll.u32 %v1120, 16
    %v1146 = vrot.slane %v1144, 5
    %v1147 = vsel %vm483, %v1142, %v1146
    %v1149 = vshrl.u32 %v1121, 16
    %v1151 = vrot.slane %v1149, 4
    %v1152 = vshll.u32 %v1121, 16
    %v1154 = vrot.slane %v1152, 5
    %v1155 = vor.u32 %v1151, %v1154
    %v1156 = vrot.slane %v1155, 4
    %v1158 = vshll.u32 %v1122, 16
    %v1160 = vrot.slane %v1158, 5
    %v1161 = vsel %vm483, %v1156, %v1160
    %v1162 = vshrl.u32 %v1122, 16
    %v1164 = vrot.slane %v1162, 4
    %v1165 = vor.u32 %v1164, %v1160
    %v1166 = vrot.slane %v1165, 4
    %v1168 = vshll.u32 %v1123, 16
    %v1170 = vrot.slane %v1168, 5
    %v1171 = vsel %vm483, %v1166, %v1170
    %v1172 = vld [vmem:[#allocation6 + $0xc0] sm:$0xf]
    %v1173 = vld [vmem:[#allocation6 + $0xc4] sm:$0xf]
    %v1174 = vld [vmem:[#allocation6 + $0xc8] sm:$0xf]
    %v1175 = vld [vmem:[#allocation6 + $0xcc] sm:$0xf]
    %v1176 = vld [vmem:[#allocation6 + $0xd0] sm:$0xf]
    %v1177 = vld [vmem:[#allocation6 + $0xd4] sm:$0xf]
    %v1178 = vld [vmem:[#allocation6 + $0xd8] sm:$0xf]
    %v1179 = vld [vmem:[#allocation6 + $0xdc] sm:$0xf]
    %v1180 = vld [vmem:[#allocation6 + $0xe0] sm:$0xf]
    %v1181 = vld [vmem:[#allocation6 + $0xe4] sm:$0xf]
    %v1182 = vld [vmem:[#allocation6 + $0xe8] sm:$0xf]
    %v1183 = vld [vmem:[#allocation6 + $0xec] sm:$0xf]
    %v1184 = vld [vmem:[#allocation6 + $0xf0] sm:$0xf]
    %v1185 = vld [vmem:[#allocation6 + $0xf4] sm:$0xf]
    %v1186 = vld [vmem:[#allocation6 + $0xf8] sm:$0xf]
    %v1187 = vld [vmem:[#allocation6 + $0xfc] sm:$0xf]
    %v1188 = vunpack.c.l.b16 %v1137
    %v1189 = vunpack.c.l.b16 %v1147
    %v1190 = vunpack.c.l.b16 %v1161
    %v1191 = vunpack.c.l.b16 %v1171
    %v1192 = vpack.c.b16 %v1189, %v1188
    %v1193 = vpack.c.b16 %v1191, %v1190
    %v1212 = vunpack.c.l.b16 %v1172
    %v1213 = vunpack.c.l.b16 %v1173
    %v1214 = vunpack.c.l.b16 %v1174
    %v1215 = vunpack.c.l.b16 %v1175
    %v1216 = vunpack.c.l.b16 %v1176
    %v1217 = vunpack.c.l.b16 %v1177
    %v1218 = vunpack.c.l.b16 %v1178
    %v1219 = vunpack.c.l.b16 %v1179
    %v1220 = vunpack.c.l.b16 %v1180
    %v1221 = vunpack.c.l.b16 %v1181
    %v1222 = vunpack.c.l.b16 %v1182
    %v1223 = vunpack.c.l.b16 %v1183
    %v1224 = vunpack.c.l.b16 %v1184
    %v1225 = vunpack.c.l.b16 %v1185
    %v1226 = vunpack.c.l.b16 %v1186
    %v1227 = vunpack.c.l.b16 %v1187
    %v1228 = vpack.c.b16 %v1213, %v1212
    %v1229 = vpack.c.b16 %v1215, %v1214
    %v1230 = vpack.c.b16 %v1217, %v1216
    %v1231 = vpack.c.b16 %v1219, %v1218
    %v1232 = vpack.c.b16 %v1221, %v1220
    %v1233 = vpack.c.b16 %v1223, %v1222
    %v1234 = vpack.c.b16 %v1225, %v1224
    %v1235 = vpack.c.b16 %v1227, %v1226
    %1244 = vmatpush.bf16.msra.mxu0 %v1235
    %1245 = vmatpush.bf16.msra.mxu0 %v1234
    %1246 = vmatpush.bf16.msra.mxu0 %v1233
    %1247 = vmatpush.bf16.msra.mxu0 %v1232
    %1248 = vmatpush.bf16.msra.mxu0 %v1231
    %1249 = vmatpush.bf16.msra.mxu0 %v1230
    %1250 = vmatpush.bf16.msra.mxu0 %v1229
    %1251 = vmatpush.bf16.msra.mxu0 %v1228
    %1252 = vmatmul.bf16.gmra.mxu0 %v1192
    %v1253 = vpop.f32.mrf.mxu0
    %v1254 = vadd.f32 0.0, %v1253
    %v1255 = vpop.f32.mrf.mxu0
    %v1256 = vadd.f32 0.0, %v1255
    %1257 = vmatmul.bf16.gmra.mxu0 %v1193
    %v1258 = vpop.f32.mrf.mxu0
    %v1259 = vadd.f32 0.0, %v1258
    %v1260 = vpop.f32.mrf.mxu0
    %v1261 = vadd.f32 0.0, %v1260
    %1262 = vdwg.mxu0
    %v1263 = vadd.f32 %v1114, %v1254
    %v1264 = vadd.f32 %v1115, %v1256
    %v1265 = vadd.f32 %v1116, %v1259
    %v1266 = vadd.f32 %v1117, %v1261
    %v1267 = vld [vmem:[#allocation3 + $0x4] sm:$0xe]
    %v1268 = vld [vmem:[#allocation3 + $0x14] sm:$0xe]
    %v1275 = vrot.slane %v1267, 5
    %v1276 = vrot.slane %v1275, 4
    %v1277 = vrot.slane %v1119, 5
    %v1278 = vsel %vm637, %v1276, %v1277
    %v1279 = vrot.slane %v1277, 4
    %v1280 = vrot.slane %v1120, 5
    %v1281 = vsel %vm637, %v1279, %v1280
    %v1282 = vrot.slane %v1268, 5
    %v1283 = vrot.slane %v1282, 4
    %v1284 = vrot.slane %v1122, 5
    %v1285 = vsel %vm637, %v1283, %v1284
    %v1286 = vrot.slane %v1284, 4
    %v1287 = vrot.slane %v1123, 5
    %v1288 = vsel %vm637, %v1286, %v1287
    %v1289 = vld [vmem:[#allocation6 + $0x100] sm:$0xf]
    %v1290 = vld [vmem:[#allocation6 + $0x104] sm:$0xf]
    %v1291 = vld [vmem:[#allocation6 + $0x108] sm:$0xf]
    %v1292 = vld [vmem:[#allocation6 + $0x10c] sm:$0xf]
    %v1293 = vld [vmem:[#allocation6 + $0x110] sm:$0xf]
    %v1294 = vld [vmem:[#allocation6 + $0x114] sm:$0xf]
    %v1295 = vld [vmem:[#allocation6 + $0x118] sm:$0xf]
    %v1296 = vld [vmem:[#allocation6 + $0x11c] sm:$0xf]
    %v1297 = vld [vmem:[#allocation6 + $0x120] sm:$0xf]
    %v1298 = vld [vmem:[#allocation6 + $0x124] sm:$0xf]
    %v1299 = vld [vmem:[#allocation6 + $0x128] sm:$0xf]
    %v1300 = vld [vmem:[#allocation6 + $0x12c] sm:$0xf]
    %v1301 = vld [vmem:[#allocation6 + $0x130] sm:$0xf]
    %v1302 = vld [vmem:[#allocation6 + $0x134] sm:$0xf]
    %v1303 = vld [vmem:[#allocation6 + $0x138] sm:$0xf]
    %v1304 = vld [vmem:[#allocation6 + $0x13c] sm:$0xf]
    %v1305 = vunpack.c.l.b16 %v1278
    %v1306 = vunpack.c.l.b16 %v1281
    %v1307 = vunpack.c.l.b16 %v1285
    %v1308 = vunpack.c.l.b16 %v1288
    %v1309 = vpack.c.b16 %v1306, %v1305
    %v1310 = vpack.c.b16 %v1308, %v1307
    %v1329 = vunpack.c.l.b16 %v1289
    %v1330 = vunpack.c.l.b16 %v1290
    %v1331 = vunpack.c.l.b16 %v1291
    %v1332 = vunpack.c.l.b16 %v1292
    %v1333 = vunpack.c.l.b16 %v1293
    %v1334 = vunpack.c.l.b16 %v1294
    %v1335 = vunpack.c.l.b16 %v1295
    %v1336 = vunpack.c.l.b16 %v1296
    %v1337 = vunpack.c.l.b16 %v1297
    %v1338 = vunpack.c.l.b16 %v1298
    %v1339 = vunpack.c.l.b16 %v1299
    %v1340 = vunpack.c.l.b16 %v1300
    %v1341 = vunpack.c.l.b16 %v1301
    %v1342 = vunpack.c.l.b16 %v1302
    %v1343 = vunpack.c.l.b16 %v1303
    %v1344 = vunpack.c.l.b16 %v1304
    %v1345 = vpack.c.b16 %v1330, %v1329
    %v1346 = vpack.c.b16 %v1332, %v1331
    %v1347 = vpack.c.b16 %v1334, %v1333
    %v1348 = vpack.c.b16 %v1336, %v1335
    %v1349 = vpack.c.b16 %v1338, %v1337
    %v1350 = vpack.c.b16 %v1340, %v1339
    %v1351 = vpack.c.b16 %v1342, %v1341
    %v1352 = vpack.c.b16 %v1344, %v1343
    %1361 = vmatpush.bf16.msra.mxu0 %v1352
    %1362 = vmatpush.bf16.msra.mxu0 %v1351
    %1363 = vmatpush.bf16.msra.mxu0 %v1350
    %1364 = vmatpush.bf16.msra.mxu0 %v1349
    %1365 = vmatpush.bf16.msra.mxu0 %v1348
    %1366 = vmatpush.bf16.msra.mxu0 %v1347
    %1367 = vmatpush.bf16.msra.mxu0 %v1346
    %1368 = vmatpush.bf16.msra.mxu0 %v1345
    %1369 = vmatmul.bf16.gmra.mxu0 %v1309
    %v1370 = vpop.f32.mrf.mxu0
    %v1371 = vadd.f32 0.0, %v1370
    %v1372 = vpop.f32.mrf.mxu0
    %v1373 = vadd.f32 0.0, %v1372
    %1374 = vmatmul.bf16.gmra.mxu0 %v1310
    %v1375 = vpop.f32.mrf.mxu0
    %v1376 = vadd.f32 0.0, %v1375
    %v1377 = vpop.f32.mrf.mxu0
    %v1378 = vadd.f32 0.0, %v1377
    %1379 = vdwg.mxu0
    %v1380 = vadd.f32 %v1263, %v1371
    %v1381 = vadd.f32 %v1264, %v1373
    %v1382 = vadd.f32 %v1265, %v1376
    %v1383 = vadd.f32 %v1266, %v1378
    %v1384 = vld [vmem:[%s4] sm:$0x1]
    %v1386 = vperm.slane %v1384, 0
    %v1388 = vadd.f32 %v1380, %v1386
    %v1389 = vadd.f32 %v1381, %v1386
    %v1390 = vadd.f32 %v1382, %v1386
    %v1391 = vadd.f32 %v1383, %v1386
    %v1392 = vmax.f32 %v1388, 0.0
    %v1393 = vmax.f32 %v1389, 0.0
    %v1394 = vmax.f32 %v1390, 0.0
    %v1395 = vmax.f32 %v1391, 0.0
    %v1396 = vpack.c.bf16 %v1392, %v1392
    %v1397 = vpack.c.bf16 %v1393, %v1393
    %v1398 = vpack.c.bf16 %v1394, %v1394
    %v1399 = vpack.c.bf16 %v1395, %v1395
    %1400 = vst [vmem:[#allocation2 + $0x4] sm:$0xf] %v1396
    %1401 = vst [vmem:[#allocation2 + $0x8] sm:$0xf] %v1397
    %1402 = vst [vmem:[#allocation2 + $0x14] sm:$0xf] %v1398
    %1403 = vst [vmem:[#allocation2 + $0x18] sm:$0xf] %v1399
    %v1404 = vld [vmem:[#allocation2] sm:$0x8]
    %v1405 = vld [vmem:[#allocation2 + $0x4] sm:$0xf]
    %v1406 = vld [vmem:[#allocation2 + $0x8] sm:$0x7]
    %v1407 = vld [vmem:[#allocation2 + $0x10] sm:$0x8]
    %v1408 = vld [vmem:[#allocation2 + $0x14] sm:$0xf]
    %v1409 = vld [vmem:[#allocation2 + $0x18] sm:$0x7]
    %v1416 = vrot.slane %v1404, 7
    %v1417 = vrot.slane %v1416, 4
    %v1418 = vrot.slane %v1405, 7
    %v1419 = vsel %vm132, %v1417, %v1418
    %v1420 = vrot.slane %v1418, 4
    %v1421 = vrot.slane %v1406, 7
    %v1422 = vsel %vm132, %v1420, %v1421
    %v1423 = vrot.slane %v1407, 7
    %v1424 = vrot.slane %v1423, 4
    %v1425 = vrot.slane %v1408, 7
    %v1426 = vsel %vm132, %v1424, %v1425
    %v1427 = vrot.slane %v1425, 4
    %v1428 = vrot.slane %v1409, 7
    %v1429 = vsel %vm132, %v1427, %v1428
    %v1430 = vld [vmem:[#allocation8] sm:$0xf]
    %v1431 = vld [vmem:[#allocation8 + $0x4] sm:$0xf]
    %v1432 = vld [vmem:[#allocation8 + $0x8] sm:$0xf]
    %v1433 = vld [vmem:[#allocation8 + $0xc] sm:$0xf]
    %v1434 = vld [vmem:[#allocation8 + $0x10] sm:$0xf]
    %v1435 = vld [vmem:[#allocation8 + $0x14] sm:$0xf]
    %v1436 = vld [vmem:[#allocation8 + $0x18] sm:$0xf]
    %v1437 = vld [vmem:[#allocation8 + $0x1c] sm:$0xf]
    %v1438 = vld [vmem:[#allocation8 + $0x20] sm:$0xf]
    %v1439 = vld [vmem:[#allocation8 + $0x24] sm:$0xf]
    %v1440 = vld [vmem:[#allocation8 + $0x28] sm:$0xf]
    %v1441 = vld [vmem:[#allocation8 + $0x2c] sm:$0xf]
    %v1442 = vld [vmem:[#allocation8 + $0x30] sm:$0xf]
    %v1443 = vld [vmem:[#allocation8 + $0x34] sm:$0xf]
    %v1444 = vld [vmem:[#allocation8 + $0x38] sm:$0xf]
    %v1445 = vld [vmem:[#allocation8 + $0x3c] sm:$0xf]
    %v1446 = vld [vmem:[#allocation2 + $0x8] sm:$0xf]
    %v1447 = vld [vmem:[#allocation2 + $0x18] sm:$0xf]
    %v1449 = vshrl.u32 %v1404, 16
    %v1451 = vrot.slane %v1449, 7
    %v1452 = vrot.slane %v1451, 4
    %v1454 = vshrl.u32 %v1405, 16
    %v1456 = vrot.slane %v1454, 7
    %v1457 = vshll.u32 %v1405, 16
    %v1459 = vor.u32 %v1456, %v1457
    %v1460 = vsel %vm167, %v1452, %v1459
    %v1461 = vrot.slane %v1456, 4
    %v1463 = vshrl.u32 %v1446, 16
    %v1465 = vrot.slane %v1463, 7
    %v1466 = vshll.u32 %v1446, 16
    %v1468 = vor.u32 %v1465, %v1466
    %v1469 = vsel %vm167, %v1461, %v1468
    %v1471 = vshrl.u32 %v1407, 16
    %v1473 = vrot.slane %v1471, 7
    %v1474 = vrot.slane %v1473, 4
    %v1476 = vshrl.u32 %v1408, 16
    %v1478 = vrot.slane %v1476, 7
    %v1479 = vshll.u32 %v1408, 16
    %v1481 = vor.u32 %v1478, %v1479
    %v1482 = vsel %vm167, %v1474, %v1481
    %v1483 = vrot.slane %v1478, 4
    %v1485 = vshrl.u32 %v1447, 16
    %v1487 = vrot.slane %v1485, 7
    %v1488 = vshll.u32 %v1447, 16
    %v1490 = vor.u32 %v1487, %v1488
    %v1491 = vsel %vm167, %v1483, %v1490
    %v1492 = vld [vmem:[#allocation8 + $0x40] sm:$0xf]
    %v1493 = vld [vmem:[#allocation8 + $0x44] sm:$0xf]
    %v1494 = vld [vmem:[#allocation8 + $0x48] sm:$0xf]
    %v1495 = vld [vmem:[#allocation8 + $0x4c] sm:$0xf]
    %v1496 = vld [vmem:[#allocation8 + $0x50] sm:$0xf]
    %v1497 = vld [vmem:[#allocation8 + $0x54] sm:$0xf]
    %v1498 = vld [vmem:[#allocation8 + $0x58] sm:$0xf]
    %v1499 = vld [vmem:[#allocation8 + $0x5c] sm:$0xf]
    %v1500 = vld [vmem:[#allocation8 + $0x60] sm:$0xf]
    %v1501 = vld [vmem:[#allocation8 + $0x64] sm:$0xf]
    %v1502 = vld [vmem:[#allocation8 + $0x68] sm:$0xf]
    %v1503 = vld [vmem:[#allocation8 + $0x6c] sm:$0xf]
    %v1504 = vld [vmem:[#allocation8 + $0x70] sm:$0xf]
    %v1505 = vld [vmem:[#allocation8 + $0x74] sm:$0xf]
    %v1506 = vld [vmem:[#allocation8 + $0x78] sm:$0xf]
    %v1507 = vld [vmem:[#allocation8 + $0x7c] sm:$0xf]
    %v1508 = vunpack.c.l.b16 %v1460
    %v1509 = vunpack.c.l.b16 %v1469
    %v1510 = vunpack.c.l.b16 %v1482
    %v1511 = vunpack.c.l.b16 %v1491
    %v1512 = vpack.c.b16 %v1509, %v1508
    %v1513 = vpack.c.b16 %v1511, %v1510
    %v1532 = vunpack.c.l.b16 %v1492
    %v1533 = vunpack.c.l.b16 %v1493
    %v1534 = vunpack.c.l.b16 %v1494
    %v1535 = vunpack.c.l.b16 %v1495
    %v1536 = vunpack.c.l.b16 %v1496
    %v1537 = vunpack.c.l.b16 %v1497
    %v1538 = vunpack.c.l.b16 %v1498
    %v1539 = vunpack.c.l.b16 %v1499
    %v1540 = vunpack.c.l.b16 %v1500
    %v1541 = vunpack.c.l.b16 %v1501
    %v1542 = vunpack.c.l.b16 %v1502
    %v1543 = vunpack.c.l.b16 %v1503
    %v1544 = vunpack.c.l.b16 %v1504
    %v1545 = vunpack.c.l.b16 %v1505
    %v1546 = vunpack.c.l.b16 %v1506
    %v1547 = vunpack.c.l.b16 %v1507
    %v1548 = vpack.c.b16 %v1533, %v1532
    %v1549 = vpack.c.b16 %v1535, %v1534
    %v1550 = vpack.c.b16 %v1537, %v1536
    %v1551 = vpack.c.b16 %v1539, %v1538
    %v1552 = vpack.c.b16 %v1541, %v1540
    %v1553 = vpack.c.b16 %v1543, %v1542
    %v1554 = vpack.c.b16 %v1545, %v1544
    %v1555 = vpack.c.b16 %v1547, %v1546
    %1564 = vmatpush.bf16.msra.mxu0 %v1555
    %1565 = vmatpush.bf16.msra.mxu0 %v1554
    %1566 = vmatpush.bf16.msra.mxu0 %v1553
    %1567 = vmatpush.bf16.msra.mxu0 %v1552
    %1568 = vmatpush.bf16.msra.mxu0 %v1551
    %1569 = vmatpush.bf16.msra.mxu0 %v1550
    %1570 = vmatpush.bf16.msra.mxu0 %v1549
    %1571 = vmatpush.bf16.msra.mxu0 %v1548
    %1572 = vmatmul.bf16.gmra.mxu0 %v1512
    %v1573 = vpop.f32.mrf.mxu0
    %v1574 = vadd.f32 0.0, %v1573
    %v1575 = vpop.f32.mrf.mxu0
    %v1576 = vadd.f32 0.0, %v1575
    %1577 = vmatmul.bf16.gmra.mxu0 %v1513
    %v1578 = vpop.f32.mrf.mxu0
    %v1579 = vadd.f32 0.0, %v1578
    %v1580 = vpop.f32.mrf.mxu0
    %v1581 = vadd.f32 0.0, %v1580
    %1582 = vdwg.mxu0
    %v1583 = vunpack.c.l.b16 %v1419
    %v1584 = vunpack.c.l.b16 %v1422
    %v1585 = vunpack.c.l.b16 %v1426
    %v1586 = vunpack.c.l.b16 %v1429
    %v1587 = vpack.c.b16 %v1584, %v1583
    %v1588 = vpack.c.b16 %v1586, %v1585
    %v1607 = vunpack.c.l.b16 %v1430
    %v1608 = vunpack.c.l.b16 %v1431
    %v1609 = vunpack.c.l.b16 %v1432
    %v1610 = vunpack.c.l.b16 %v1433
    %v1611 = vunpack.c.l.b16 %v1434
    %v1612 = vunpack.c.l.b16 %v1435
    %v1613 = vunpack.c.l.b16 %v1436
    %v1614 = vunpack.c.l.b16 %v1437
    %v1615 = vunpack.c.l.b16 %v1438
    %v1616 = vunpack.c.l.b16 %v1439
    %v1617 = vunpack.c.l.b16 %v1440
    %v1618 = vunpack.c.l.b16 %v1441
    %v1619 = vunpack.c.l.b16 %v1442
    %v1620 = vunpack.c.l.b16 %v1443
    %v1621 = vunpack.c.l.b16 %v1444
    %v1622 = vunpack.c.l.b16 %v1445
    %v1623 = vpack.c.b16 %v1608, %v1607
    %v1624 = vpack.c.b16 %v1610, %v1609
    %v1625 = vpack.c.b16 %v1612, %v1611
    %v1626 = vpack.c.b16 %v1614, %v1613
    %v1627 = vpack.c.b16 %v1616, %v1615
    %v1628 = vpack.c.b16 %v1618, %v1617
    %v1629 = vpack.c.b16 %v1620, %v1619
    %v1630 = vpack.c.b16 %v1622, %v1621
    %1639 = vmatpush.bf16.msra.mxu0 %v1630
    %1640 = vmatpush.bf16.msra.mxu0 %v1629
    %1641 = vmatpush.bf16.msra.mxu0 %v1628
    %1642 = vmatpush.bf16.msra.mxu0 %v1627
    %1643 = vmatpush.bf16.msra.mxu0 %v1626
    %1644 = vmatpush.bf16.msra.mxu0 %v1625
    %1645 = vmatpush.bf16.msra.mxu0 %v1624
    %1646 = vmatpush.bf16.msra.mxu0 %v1623
    %1647 = vmatmul.bf16.gmra.mxu0 %v1587
    %v1648 = vpop.f32.mrf.mxu0
    %v1649 = vadd.f32 %v1574, %v1648
    %v1650 = vpop.f32.mrf.mxu0
    %v1651 = vadd.f32 %v1576, %v1650
    %1652 = vmatmul.bf16.gmra.mxu0 %v1588
    %v1653 = vpop.f32.mrf.mxu0
    %v1654 = vadd.f32 %v1579, %v1653
    %v1655 = vpop.f32.mrf.mxu0
    %v1656 = vadd.f32 %v1581, %v1655
    %1657 = vdwg.mxu0
    %v1658 = vld [vmem:[#allocation8 + $0x80] sm:$0xf]
    %v1659 = vld [vmem:[#allocation8 + $0x84] sm:$0xf]
    %v1660 = vld [vmem:[#allocation8 + $0x88] sm:$0xf]
    %v1661 = vld [vmem:[#allocation8 + $0x8c] sm:$0xf]
    %v1662 = vld [vmem:[#allocation8 + $0x90] sm:$0xf]
    %v1663 = vld [vmem:[#allocation8 + $0x94] sm:$0xf]
    %v1664 = vld [vmem:[#allocation8 + $0x98] sm:$0xf]
    %v1665 = vld [vmem:[#allocation8 + $0x9c] sm:$0xf]
    %v1666 = vld [vmem:[#allocation8 + $0xa0] sm:$0xf]
    %v1667 = vld [vmem:[#allocation8 + $0xa4] sm:$0xf]
    %v1668 = vld [vmem:[#allocation8 + $0xa8] sm:$0xf]
    %v1669 = vld [vmem:[#allocation8 + $0xac] sm:$0xf]
    %v1670 = vld [vmem:[#allocation8 + $0xb0] sm:$0xf]
    %v1671 = vld [vmem:[#allocation8 + $0xb4] sm:$0xf]
    %v1672 = vld [vmem:[#allocation8 + $0xb8] sm:$0xf]
    %v1673 = vld [vmem:[#allocation8 + $0xbc] sm:$0xf]
    %v1676 = vunpack.c.l.b16 %v1405
    %v1677 = vunpack.c.l.b16 %v1446
    %v1678 = vunpack.c.l.b16 %v1408
    %v1679 = vunpack.c.l.b16 %v1447
    %v1680 = vpack.c.b16 %v1677, %v1676
    %v1681 = vpack.c.b16 %v1679, %v1678
    %v1700 = vunpack.c.l.b16 %v1658
    %v1701 = vunpack.c.l.b16 %v1659
    %v1702 = vunpack.c.l.b16 %v1660
    %v1703 = vunpack.c.l.b16 %v1661
    %v1704 = vunpack.c.l.b16 %v1662
    %v1705 = vunpack.c.l.b16 %v1663
    %v1706 = vunpack.c.l.b16 %v1664
    %v1707 = vunpack.c.l.b16 %v1665
    %v1708 = vunpack.c.l.b16 %v1666
    %v1709 = vunpack.c.l.b16 %v1667
    %v1710 = vunpack.c.l.b16 %v1668
    %v1711 = vunpack.c.l.b16 %v1669
    %v1712 = vunpack.c.l.b16 %v1670
    %v1713 = vunpack.c.l.b16 %v1671
    %v1714 = vunpack.c.l.b16 %v1672
    %v1715 = vunpack.c.l.b16 %v1673
    %v1716 = vpack.c.b16 %v1701, %v1700
    %v1717 = vpack.c.b16 %v1703, %v1702
    %v1718 = vpack.c.b16 %v1705, %v1704
    %v1719 = vpack.c.b16 %v1707, %v1706
    %v1720 = vpack.c.b16 %v1709, %v1708
    %v1721 = vpack.c.b16 %v1711, %v1710
    %v1722 = vpack.c.b16 %v1713, %v1712
    %v1723 = vpack.c.b16 %v1715, %v1714
    %1732 = vmatpush.bf16.msra.mxu0 %v1723
    %1733 = vmatpush.bf16.msra.mxu0 %v1722
    %1734 = vmatpush.bf16.msra.mxu0 %v1721
    %1735 = vmatpush.bf16.msra.mxu0 %v1720
    %1736 = vmatpush.bf16.msra.mxu0 %v1719
    %1737 = vmatpush.bf16.msra.mxu0 %v1718
    %1738 = vmatpush.bf16.msra.mxu0 %v1717
    %1739 = vmatpush.bf16.msra.mxu0 %v1716
    %1740 = vmatmul.bf16.gmra.mxu0 %v1680
    %v1741 = vpop.f32.mrf.mxu0
    %v1742 = vadd.f32 0.0, %v1741
    %v1743 = vpop.f32.mrf.mxu0
    %v1744 = vadd.f32 0.0, %v1743
    %1745 = vmatmul.bf16.gmra.mxu0 %v1681
    %v1746 = vpop.f32.mrf.mxu0
    %v1747 = vadd.f32 0.0, %v1746
    %v1748 = vpop.f32.mrf.mxu0
    %v1749 = vadd.f32 0.0, %v1748
    %1750 = vdwg.mxu0
    %v1751 = vadd.f32 %v1649, %v1742
    %v1752 = vadd.f32 %v1651, %v1744
    %v1753 = vadd.f32 %v1654, %v1747
    %v1754 = vadd.f32 %v1656, %v1749
    %v1755 = vld [vmem:[#allocation2 + $0x4] sm:$0xf]
    %v1756 = vld [vmem:[#allocation2 + $0x8] sm:$0xf]
    %v1757 = vld [vmem:[#allocation2 + $0xc] sm:$0x1]
    %v1758 = vld [vmem:[#allocation2 + $0x14] sm:$0xf]
    %v1759 = vld [vmem:[#allocation2 + $0x18] sm:$0xf]
    %v1760 = vld [vmem:[#allocation2 + $0x1c] sm:$0x1]
    %v1762 = vshrl.u32 %v1755, 16
    %v1764 = vrot.slane %v1762, 4
    %v1765 = vshll.u32 %v1755, 16
    %v1767 = vrot.slane %v1765, 5
    %v1768 = vor.u32 %v1764, %v1767
    %v1769 = vrot.slane %v1768, 4
    %v1771 = vshll.u32 %v1756, 16
    %v1773 = vrot.slane %v1771, 5
    %v1774 = vsel %vm483, %v1769, %v1773
    %v1775 = vshrl.u32 %v1756, 16
    %v1777 = vrot.slane %v1775, 4
    %v1778 = vor.u32 %v1777, %v1773
    %v1779 = vrot.slane %v1778, 4
    %v1781 = vshll.u32 %v1757, 16
    %v1783 = vrot.slane %v1781, 5
    %v1784 = vsel %vm483, %v1779, %v1783
    %v1786 = vshrl.u32 %v1758, 16
    %v1788 = vrot.slane %v1786, 4
    %v1789 = vshll.u32 %v1758, 16
    %v1791 = vrot.slane %v1789, 5
    %v1792 = vor.u32 %v1788, %v1791
    %v1793 = vrot.slane %v1792, 4
    %v1795 = vshll.u32 %v1759, 16
    %v1797 = vrot.slane %v1795, 5
    %v1798 = vsel %vm483, %v1793, %v1797
    %v1799 = vshrl.u32 %v1759, 16
    %v1801 = vrot.slane %v1799, 4
    %v1802 = vor.u32 %v1801, %v1797
    %v1803 = vrot.slane %v1802, 4
    %v1805 = vshll.u32 %v1760, 16
    %v1807 = vrot.slane %v1805, 5
    %v1808 = vsel %vm483, %v1803, %v1807
    %v1809 = vld [vmem:[#allocation8 + $0xc0] sm:$0xf]
    %v1810 = vld [vmem:[#allocation8 + $0xc4] sm:$0xf]
    %v1811 = vld [vmem:[#allocation8 + $0xc8] sm:$0xf]
    %v1812 = vld [vmem:[#allocation8 + $0xcc] sm:$0xf]
    %v1813 = vld [vmem:[#allocation8 + $0xd0] sm:$0xf]
    %v1814 = vld [vmem:[#allocation8 + $0xd4] sm:$0xf]
    %v1815 = vld [vmem:[#allocation8 + $0xd8] sm:$0xf]
    %v1816 = vld [vmem:[#allocation8 + $0xdc] sm:$0xf]
    %v1817 = vld [vmem:[#allocation8 + $0xe0] sm:$0xf]
    %v1818 = vld [vmem:[#allocation8 + $0xe4] sm:$0xf]
    %v1819 = vld [vmem:[#allocation8 + $0xe8] sm:$0xf]
    %v1820 = vld [vmem:[#allocation8 + $0xec] sm:$0xf]
    %v1821 = vld [vmem:[#allocation8 + $0xf0] sm:$0xf]
    %v1822 = vld [vmem:[#allocation8 + $0xf4] sm:$0xf]
    %v1823 = vld [vmem:[#allocation8 + $0xf8] sm:$0xf]
    %v1824 = vld [vmem:[#allocation8 + $0xfc] sm:$0xf]
    %v1825 = vunpack.c.l.b16 %v1774
    %v1826 = vunpack.c.l.b16 %v1784
    %v1827 = vunpack.c.l.b16 %v1798
    %v1828 = vunpack.c.l.b16 %v1808
    %v1829 = vpack.c.b16 %v1826, %v1825
    %v1830 = vpack.c.b16 %v1828, %v1827
    %v1849 = vunpack.c.l.b16 %v1809
    %v1850 = vunpack.c.l.b16 %v1810
    %v1851 = vunpack.c.l.b16 %v1811
    %v1852 = vunpack.c.l.b16 %v1812
    %v1853 = vunpack.c.l.b16 %v1813
    %v1854 = vunpack.c.l.b16 %v1814
    %v1855 = vunpack.c.l.b16 %v1815
    %v1856 = vunpack.c.l.b16 %v1816
    %v1857 = vunpack.c.l.b16 %v1817
    %v1858 = vunpack.c.l.b16 %v1818
    %v1859 = vunpack.c.l.b16 %v1819
    %v1860 = vunpack.c.l.b16 %v1820
    %v1861 = vunpack.c.l.b16 %v1821
    %v1862 = vunpack.c.l.b16 %v1822
    %v1863 = vunpack.c.l.b16 %v1823
    %v1864 = vunpack.c.l.b16 %v1824
    %v1865 = vpack.c.b16 %v1850, %v1849
    %v1866 = vpack.c.b16 %v1852, %v1851
    %v1867 = vpack.c.b16 %v1854, %v1853
    %v1868 = vpack.c.b16 %v1856, %v1855
    %v1869 = vpack.c.b16 %v1858, %v1857
    %v1870 = vpack.c.b16 %v1860, %v1859
    %v1871 = vpack.c.b16 %v1862, %v1861
    %v1872 = vpack.c.b16 %v1864, %v1863
    %1881 = vmatpush.bf16.msra.mxu0 %v1872
    %1882 = vmatpush.bf16.msra.mxu0 %v1871
    %1883 = vmatpush.bf16.msra.mxu0 %v1870
    %1884 = vmatpush.bf16.msra.mxu0 %v1869
    %1885 = vmatpush.bf16.msra.mxu0 %v1868
    %1886 = vmatpush.bf16.msra.mxu0 %v1867
    %1887 = vmatpush.bf16.msra.mxu0 %v1866
    %1888 = vmatpush.bf16.msra.mxu0 %v1865
    %1889 = vmatmul.bf16.gmra.mxu0 %v1829
    %v1890 = vpop.f32.mrf.mxu0
    %v1891 = vadd.f32 0.0, %v1890
    %v1892 = vpop.f32.mrf.mxu0
    %v1893 = vadd.f32 0.0, %v1892
    %1894 = vmatmul.bf16.gmra.mxu0 %v1830
    %v1895 = vpop.f32.mrf.mxu0
    %v1896 = vadd.f32 0.0, %v1895
    %v1897 = vpop.f32.mrf.mxu0
    %v1898 = vadd.f32 0.0, %v1897
    %1899 = vdwg.mxu0
    %v1900 = vadd.f32 %v1751, %v1891
    %v1901 = vadd.f32 %v1752, %v1893
    %v1902 = vadd.f32 %v1753, %v1896
    %v1903 = vadd.f32 %v1754, %v1898
    %v1904 = vld [vmem:[#allocation2 + $0x4] sm:$0xe]
    %v1905 = vld [vmem:[#allocation2 + $0x14] sm:$0xe]
    %v1912 = vrot.slane %v1904, 5
    %v1913 = vrot.slane %v1912, 4
    %v1914 = vrot.slane %v1756, 5
    %v1915 = vsel %vm637, %v1913, %v1914
    %v1916 = vrot.slane %v1914, 4
    %v1917 = vrot.slane %v1757, 5
    %v1918 = vsel %vm637, %v1916, %v1917
    %v1919 = vrot.slane %v1905, 5
    %v1920 = vrot.slane %v1919, 4
    %v1921 = vrot.slane %v1759, 5
    %v1922 = vsel %vm637, %v1920, %v1921
    %v1923 = vrot.slane %v1921, 4
    %v1924 = vrot.slane %v1760, 5
    %v1925 = vsel %vm637, %v1923, %v1924
    %v1926 = vld [vmem:[#allocation8 + $0x100] sm:$0xf]
    %v1927 = vld [vmem:[#allocation8 + $0x104] sm:$0xf]
    %v1928 = vld [vmem:[#allocation8 + $0x108] sm:$0xf]
    %v1929 = vld [vmem:[#allocation8 + $0x10c] sm:$0xf]
    %v1930 = vld [vmem:[#allocation8 + $0x110] sm:$0xf]
    %v1931 = vld [vmem:[#allocation8 + $0x114] sm:$0xf]
    %v1932 = vld [vmem:[#allocation8 + $0x118] sm:$0xf]
    %v1933 = vld [vmem:[#allocation8 + $0x11c] sm:$0xf]
    %v1934 = vld [vmem:[#allocation8 + $0x120] sm:$0xf]
    %v1935 = vld [vmem:[#allocation8 + $0x124] sm:$0xf]
    %v1936 = vld [vmem:[#allocation8 + $0x128] sm:$0xf]
    %v1937 = vld [vmem:[#allocation8 + $0x12c] sm:$0xf]
    %v1938 = vld [vmem:[#allocation8 + $0x130] sm:$0xf]
    %v1939 = vld [vmem:[#allocation8 + $0x134] sm:$0xf]
    %v1940 = vld [vmem:[#allocation8 + $0x138] sm:$0xf]
    %v1941 = vld [vmem:[#allocation8 + $0x13c] sm:$0xf]
    %v1942 = vunpack.c.l.b16 %v1915
    %v1943 = vunpack.c.l.b16 %v1918
    %v1944 = vunpack.c.l.b16 %v1922
    %v1945 = vunpack.c.l.b16 %v1925
    %v1946 = vpack.c.b16 %v1943, %v1942
    %v1947 = vpack.c.b16 %v1945, %v1944
    %v1966 = vunpack.c.l.b16 %v1926
    %v1967 = vunpack.c.l.b16 %v1927
    %v1968 = vunpack.c.l.b16 %v1928
    %v1969 = vunpack.c.l.b16 %v1929
    %v1970 = vunpack.c.l.b16 %v1930
    %v1971 = vunpack.c.l.b16 %v1931
    %v1972 = vunpack.c.l.b16 %v1932
    %v1973 = vunpack.c.l.b16 %v1933
    %v1974 = vunpack.c.l.b16 %v1934
    %v1975 = vunpack.c.l.b16 %v1935
    %v1976 = vunpack.c.l.b16 %v1936
    %v1977 = vunpack.c.l.b16 %v1937
    %v1978 = vunpack.c.l.b16 %v1938
    %v1979 = vunpack.c.l.b16 %v1939
    %v1980 = vunpack.c.l.b16 %v1940
    %v1981 = vunpack.c.l.b16 %v1941
    %v1982 = vpack.c.b16 %v1967, %v1966
    %v1983 = vpack.c.b16 %v1969, %v1968
    %v1984 = vpack.c.b16 %v1971, %v1970
    %v1985 = vpack.c.b16 %v1973, %v1972
    %v1986 = vpack.c.b16 %v1975, %v1974
    %v1987 = vpack.c.b16 %v1977, %v1976
    %v1988 = vpack.c.b16 %v1979, %v1978
    %v1989 = vpack.c.b16 %v1981, %v1980
    %1998 = vmatpush.bf16.msra.mxu0 %v1989
    %1999 = vmatpush.bf16.msra.mxu0 %v1988
    %2000 = vmatpush.bf16.msra.mxu0 %v1987
    %2001 = vmatpush.bf16.msra.mxu0 %v1986
    %2002 = vmatpush.bf16.msra.mxu0 %v1985
    %2003 = vmatpush.bf16.msra.mxu0 %v1984
    %2004 = vmatpush.bf16.msra.mxu0 %v1983
    %2005 = vmatpush.bf16.msra.mxu0 %v1982
    %2006 = vmatmul.bf16.gmra.mxu0 %v1946
    %v2007 = vpop.f32.mrf.mxu0
    %v2008 = vadd.f32 0.0, %v2007
    %v2009 = vpop.f32.mrf.mxu0
    %v2010 = vadd.f32 0.0, %v2009
    %2011 = vmatmul.bf16.gmra.mxu0 %v1947
    %v2012 = vpop.f32.mrf.mxu0
    %v2013 = vadd.f32 0.0, %v2012
    %v2014 = vpop.f32.mrf.mxu0
    %v2015 = vadd.f32 0.0, %v2014
    %2016 = vdwg.mxu0
    %v2017 = vadd.f32 %v1900, %v2008
    %v2018 = vadd.f32 %v1901, %v2010
    %v2019 = vadd.f32 %v1902, %v2013
    %v2020 = vadd.f32 %v1903, %v2015
    %v2021 = vld [vmem:[%s6] sm:$0x1]
    %v2023 = vperm.slane %v2021, 0
    %v2025 = vadd.f32 %v2017, %v2023
    %v2026 = vadd.f32 %v2018, %v2023
    %v2027 = vadd.f32 %v2019, %v2023
    %v2028 = vadd.f32 %v2020, %v2023
    %v2029 = vmax.f32 %v2025, 0.0
    %v2030 = vmax.f32 %v2026, 0.0
    %v2031 = vmax.f32 %v2027, 0.0
    %v2032 = vmax.f32 %v2028, 0.0
    %v2033 = vpack.c.bf16 %v2029, %v2029
    %v2034 = vpack.c.bf16 %v2030, %v2030
    %v2035 = vpack.c.bf16 %v2031, %v2031
    %v2036 = vpack.c.bf16 %v2032, %v2032
    %2037 = vst [vmem:[#allocation3 + $0x4] sm:$0xf] %v2033
    %2038 = vst [vmem:[#allocation3 + $0x8] sm:$0xf] %v2034
    %2039 = vst [vmem:[#allocation3 + $0x14] sm:$0xf] %v2035
    %2040 = vst [vmem:[#allocation3 + $0x18] sm:$0xf] %v2036
    %v2041 = vld [vmem:[#allocation3] sm:$0x8]
    %v2042 = vld [vmem:[#allocation3 + $0x4] sm:$0xf]
    %v2043 = vld [vmem:[#allocation3 + $0x8] sm:$0x7]
    %v2044 = vld [vmem:[#allocation3 + $0x10] sm:$0x8]
    %v2045 = vld [vmem:[#allocation3 + $0x14] sm:$0xf]
    %v2046 = vld [vmem:[#allocation3 + $0x18] sm:$0x7]
    %v2053 = vrot.slane %v2041, 7
    %v2054 = vrot.slane %v2053, 4
    %v2055 = vrot.slane %v2042, 7
    %v2056 = vsel %vm132, %v2054, %v2055
    %v2057 = vrot.slane %v2055, 4
    %v2058 = vrot.slane %v2043, 7
    %v2059 = vsel %vm132, %v2057, %v2058
    %v2060 = vrot.slane %v2044, 7
    %v2061 = vrot.slane %v2060, 4
    %v2062 = vrot.slane %v2045, 7
    %v2063 = vsel %vm132, %v2061, %v2062
    %v2064 = vrot.slane %v2062, 4
    %v2065 = vrot.slane %v2046, 7
    %v2066 = vsel %vm132, %v2064, %v2065
    %v2067 = vld [vmem:[#allocation9] sm:$0xf]
    %v2068 = vld [vmem:[#allocation9 + $0x4] sm:$0xf]
    %v2069 = vld [vmem:[#allocation9 + $0x8] sm:$0xf]
    %v2070 = vld [vmem:[#allocation9 + $0xc] sm:$0xf]
    %v2071 = vld [vmem:[#allocation9 + $0x10] sm:$0xf]
    %v2072 = vld [vmem:[#allocation9 + $0x14] sm:$0xf]
    %v2073 = vld [vmem:[#allocation9 + $0x18] sm:$0xf]
    %v2074 = vld [vmem:[#allocation9 + $0x1c] sm:$0xf]
    %v2075 = vld [vmem:[#allocation9 + $0x20] sm:$0xf]
    %v2076 = vld [vmem:[#allocation9 + $0x24] sm:$0xf]
    %v2077 = vld [vmem:[#allocation9 + $0x28] sm:$0xf]
    %v2078 = vld [vmem:[#allocation9 + $0x2c] sm:$0xf]
    %v2079 = vld [vmem:[#allocation9 + $0x30] sm:$0xf]
    %v2080 = vld [vmem:[#allocation9 + $0x34] sm:$0xf]
    %v2081 = vld [vmem:[#allocation9 + $0x38] sm:$0xf]
    %v2082 = vld [vmem:[#allocation9 + $0x3c] sm:$0xf]
    %v2083 = vld [vmem:[#allocation3 + $0x8] sm:$0xf]
    %v2084 = vld [vmem:[#allocation3 + $0x18] sm:$0xf]
    %v2086 = vshrl.u32 %v2041, 16
    %v2088 = vrot.slane %v2086, 7
    %v2089 = vrot.slane %v2088, 4
    %v2091 = vshrl.u32 %v2042, 16
    %v2093 = vrot.slane %v2091, 7
    %v2094 = vshll.u32 %v2042, 16
    %v2096 = vor.u32 %v2093, %v2094
    %v2097 = vsel %vm167, %v2089, %v2096
    %v2098 = vrot.slane %v2093, 4
    %v2100 = vshrl.u32 %v2083, 16
    %v2102 = vrot.slane %v2100, 7
    %v2103 = vshll.u32 %v2083, 16
    %v2105 = vor.u32 %v2102, %v2103
    %v2106 = vsel %vm167, %v2098, %v2105
    %v2108 = vshrl.u32 %v2044, 16
    %v2110 = vrot.slane %v2108, 7
    %v2111 = vrot.slane %v2110, 4
    %v2113 = vshrl.u32 %v2045, 16
    %v2115 = vrot.slane %v2113, 7
    %v2116 = vshll.u32 %v2045, 16
    %v2118 = vor.u32 %v2115, %v2116
    %v2119 = vsel %vm167, %v2111, %v2118
    %v2120 = vrot.slane %v2115, 4
    %v2122 = vshrl.u32 %v2084, 16
    %v2124 = vrot.slane %v2122, 7
    %v2125 = vshll.u32 %v2084, 16
    %v2127 = vor.u32 %v2124, %v2125
    %v2128 = vsel %vm167, %v2120, %v2127
    %v2129 = vld [vmem:[#allocation9 + $0x40] sm:$0xf]
    %v2130 = vld [vmem:[#allocation9 + $0x44] sm:$0xf]
    %v2131 = vld [vmem:[#allocation9 + $0x48] sm:$0xf]
    %v2132 = vld [vmem:[#allocation9 + $0x4c] sm:$0xf]
    %v2133 = vld [vmem:[#allocation9 + $0x50] sm:$0xf]
    %v2134 = vld [vmem:[#allocation9 + $0x54] sm:$0xf]
    %v2135 = vld [vmem:[#allocation9 + $0x58] sm:$0xf]
    %v2136 = vld [vmem:[#allocation9 + $0x5c] sm:$0xf]
    %v2137 = vld [vmem:[#allocation9 + $0x60] sm:$0xf]
    %v2138 = vld [vmem:[#allocation9 + $0x64] sm:$0xf]
    %v2139 = vld [vmem:[#allocation9 + $0x68] sm:$0xf]
    %v2140 = vld [vmem:[#allocation9 + $0x6c] sm:$0xf]
    %v2141 = vld [vmem:[#allocation9 + $0x70] sm:$0xf]
    %v2142 = vld [vmem:[#allocation9 + $0x74] sm:$0xf]
    %v2143 = vld [vmem:[#allocation9 + $0x78] sm:$0xf]
    %v2144 = vld [vmem:[#allocation9 + $0x7c] sm:$0xf]
    %v2145 = vunpack.c.l.b16 %v2097
    %v2146 = vunpack.c.l.b16 %v2106
    %v2147 = vunpack.c.l.b16 %v2119
    %v2148 = vunpack.c.l.b16 %v2128
    %v2149 = vpack.c.b16 %v2146, %v2145
    %v2150 = vpack.c.b16 %v2148, %v2147
    %v2169 = vunpack.c.l.b16 %v2129
    %v2170 = vunpack.c.l.b16 %v2130
    %v2171 = vunpack.c.l.b16 %v2131
    %v2172 = vunpack.c.l.b16 %v2132
    %v2173 = vunpack.c.l.b16 %v2133
    %v2174 = vunpack.c.l.b16 %v2134
    %v2175 = vunpack.c.l.b16 %v2135
    %v2176 = vunpack.c.l.b16 %v2136
    %v2177 = vunpack.c.l.b16 %v2137
    %v2178 = vunpack.c.l.b16 %v2138
    %v2179 = vunpack.c.l.b16 %v2139
    %v2180 = vunpack.c.l.b16 %v2140
    %v2181 = vunpack.c.l.b16 %v2141
    %v2182 = vunpack.c.l.b16 %v2142
    %v2183 = vunpack.c.l.b16 %v2143
    %v2184 = vunpack.c.l.b16 %v2144
    %v2185 = vpack.c.b16 %v2170, %v2169
    %v2186 = vpack.c.b16 %v2172, %v2171
    %v2187 = vpack.c.b16 %v2174, %v2173
    %v2188 = vpack.c.b16 %v2176, %v2175
    %v2189 = vpack.c.b16 %v2178, %v2177
    %v2190 = vpack.c.b16 %v2180, %v2179
    %v2191 = vpack.c.b16 %v2182, %v2181
    %v2192 = vpack.c.b16 %v2184, %v2183
    %2201 = vmatpush.bf16.msra.mxu0 %v2192
    %2202 = vmatpush.bf16.msra.mxu0 %v2191
    %2203 = vmatpush.bf16.msra.mxu0 %v2190
    %2204 = vmatpush.bf16.msra.mxu0 %v2189
    %2205 = vmatpush.bf16.msra.mxu0 %v2188
    %2206 = vmatpush.bf16.msra.mxu0 %v2187
    %2207 = vmatpush.bf16.msra.mxu0 %v2186
    %2208 = vmatpush.bf16.msra.mxu0 %v2185
    %2209 = vmatmul.bf16.gmra.mxu0 %v2149
    %v2210 = vpop.f32.mrf.mxu0
    %v2211 = vadd.f32 0.0, %v2210
    %v2212 = vpop.f32.mrf.mxu0
    %v2213 = vadd.f32 0.0, %v2212
    %2214 = vmatmul.bf16.gmra.mxu0 %v2150
    %v2215 = vpop.f32.mrf.mxu0
    %v2216 = vadd.f32 0.0, %v2215
    %v2217 = vpop.f32.mrf.mxu0
    %v2218 = vadd.f32 0.0, %v2217
    %2219 = vdwg.mxu0
    %v2220 = vunpack.c.l.b16 %v2056
    %v2221 = vunpack.c.l.b16 %v2059
    %v2222 = vunpack.c.l.b16 %v2063
    %v2223 = vunpack.c.l.b16 %v2066
    %v2224 = vpack.c.b16 %v2221, %v2220
    %v2225 = vpack.c.b16 %v2223, %v2222
    %v2244 = vunpack.c.l.b16 %v2067
    %v2245 = vunpack.c.l.b16 %v2068
    %v2246 = vunpack.c.l.b16 %v2069
    %v2247 = vunpack.c.l.b16 %v2070
    %v2248 = vunpack.c.l.b16 %v2071
    %v2249 = vunpack.c.l.b16 %v2072
    %v2250 = vunpack.c.l.b16 %v2073
    %v2251 = vunpack.c.l.b16 %v2074
    %v2252 = vunpack.c.l.b16 %v2075
    %v2253 = vunpack.c.l.b16 %v2076
    %v2254 = vunpack.c.l.b16 %v2077
    %v2255 = vunpack.c.l.b16 %v2078
    %v2256 = vunpack.c.l.b16 %v2079
    %v2257 = vunpack.c.l.b16 %v2080
    %v2258 = vunpack.c.l.b16 %v2081
    %v2259 = vunpack.c.l.b16 %v2082
    %v2260 = vpack.c.b16 %v2245, %v2244
    %v2261 = vpack.c.b16 %v2247, %v2246
    %v2262 = vpack.c.b16 %v2249, %v2248
    %v2263 = vpack.c.b16 %v2251, %v2250
    %v2264 = vpack.c.b16 %v2253, %v2252
    %v2265 = vpack.c.b16 %v2255, %v2254
    %v2266 = vpack.c.b16 %v2257, %v2256
    %v2267 = vpack.c.b16 %v2259, %v2258
    %2276 = vmatpush.bf16.msra.mxu0 %v2267
    %2277 = vmatpush.bf16.msra.mxu0 %v2266
    %2278 = vmatpush.bf16.msra.mxu0 %v2265
    %2279 = vmatpush.bf16.msra.mxu0 %v2264
    %2280 = vmatpush.bf16.msra.mxu0 %v2263
    %2281 = vmatpush.bf16.msra.mxu0 %v2262
    %2282 = vmatpush.bf16.msra.mxu0 %v2261
    %2283 = vmatpush.bf16.msra.mxu0 %v2260
    %2284 = vmatmul.bf16.gmra.mxu0 %v2224
    %v2285 = vpop.f32.mrf.mxu0
    %v2286 = vadd.f32 %v2211, %v2285
    %v2287 = vpop.f32.mrf.mxu0
    %v2288 = vadd.f32 %v2213, %v2287
    %2289 = vmatmul.bf16.gmra.mxu0 %v2225
    %v2290 = vpop.f32.mrf.mxu0
    %v2291 = vadd.f32 %v2216, %v2290
    %v2292 = vpop.f32.mrf.mxu0
    %v2293 = vadd.f32 %v2218, %v2292
    %2294 = vdwg.mxu0
    %v2295 = vld [vmem:[#allocation9 + $0x80] sm:$0xf]
    %v2296 = vld [vmem:[#allocation9 + $0x84] sm:$0xf]
    %v2297 = vld [vmem:[#allocation9 + $0x88] sm:$0xf]
    %v2298 = vld [vmem:[#allocation9 + $0x8c] sm:$0xf]
    %v2299 = vld [vmem:[#allocation9 + $0x90] sm:$0xf]
    %v2300 = vld [vmem:[#allocation9 + $0x94] sm:$0xf]
    %v2301 = vld [vmem:[#allocation9 + $0x98] sm:$0xf]
    %v2302 = vld [vmem:[#allocation9 + $0x9c] sm:$0xf]
    %v2303 = vld [vmem:[#allocation9 + $0xa0] sm:$0xf]
    %v2304 = vld [vmem:[#allocation9 + $0xa4] sm:$0xf]
    %v2305 = vld [vmem:[#allocation9 + $0xa8] sm:$0xf]
    %v2306 = vld [vmem:[#allocation9 + $0xac] sm:$0xf]
    %v2307 = vld [vmem:[#allocation9 + $0xb0] sm:$0xf]
    %v2308 = vld [vmem:[#allocation9 + $0xb4] sm:$0xf]
    %v2309 = vld [vmem:[#allocation9 + $0xb8] sm:$0xf]
    %v2310 = vld [vmem:[#allocation9 + $0xbc] sm:$0xf]
    %v2313 = vunpack.c.l.b16 %v2042
    %v2314 = vunpack.c.l.b16 %v2083
    %v2315 = vunpack.c.l.b16 %v2045
    %v2316 = vunpack.c.l.b16 %v2084
    %v2317 = vpack.c.b16 %v2314, %v2313
    %v2318 = vpack.c.b16 %v2316, %v2315
    %v2337 = vunpack.c.l.b16 %v2295
    %v2338 = vunpack.c.l.b16 %v2296
    %v2339 = vunpack.c.l.b16 %v2297
    %v2340 = vunpack.c.l.b16 %v2298
    %v2341 = vunpack.c.l.b16 %v2299
    %v2342 = vunpack.c.l.b16 %v2300
    %v2343 = vunpack.c.l.b16 %v2301
    %v2344 = vunpack.c.l.b16 %v2302
    %v2345 = vunpack.c.l.b16 %v2303
    %v2346 = vunpack.c.l.b16 %v2304
    %v2347 = vunpack.c.l.b16 %v2305
    %v2348 = vunpack.c.l.b16 %v2306
    %v2349 = vunpack.c.l.b16 %v2307
    %v2350 = vunpack.c.l.b16 %v2308
    %v2351 = vunpack.c.l.b16 %v2309
    %v2352 = vunpack.c.l.b16 %v2310
    %v2353 = vpack.c.b16 %v2338, %v2337
    %v2354 = vpack.c.b16 %v2340, %v2339
    %v2355 = vpack.c.b16 %v2342, %v2341
    %v2356 = vpack.c.b16 %v2344, %v2343
    %v2357 = vpack.c.b16 %v2346, %v2345
    %v2358 = vpack.c.b16 %v2348, %v2347
    %v2359 = vpack.c.b16 %v2350, %v2349
    %v2360 = vpack.c.b16 %v2352, %v2351
    %2369 = vmatpush.bf16.msra.mxu0 %v2360
    %2370 = vmatpush.bf16.msra.mxu0 %v2359
    %2371 = vmatpush.bf16.msra.mxu0 %v2358
    %2372 = vmatpush.bf16.msra.mxu0 %v2357
    %2373 = vmatpush.bf16.msra.mxu0 %v2356
    %2374 = vmatpush.bf16.msra.mxu0 %v2355
    %2375 = vmatpush.bf16.msra.mxu0 %v2354
    %2376 = vmatpush.bf16.msra.mxu0 %v2353
    %2377 = vmatmul.bf16.gmra.mxu0 %v2317
    %v2378 = vpop.f32.mrf.mxu0
    %v2379 = vadd.f32 0.0, %v2378
    %v2380 = vpop.f32.mrf.mxu0
    %v2381 = vadd.f32 0.0, %v2380
    %2382 = vmatmul.bf16.gmra.mxu0 %v2318
    %v2383 = vpop.f32.mrf.mxu0
    %v2384 = vadd.f32 0.0, %v2383
    %v2385 = vpop.f32.mrf.mxu0
    %v2386 = vadd.f32 0.0, %v2385
    %2387 = vdwg.mxu0
    %v2388 = vadd.f32 %v2286, %v2379
    %v2389 = vadd.f32 %v2288, %v2381
    %v2390 = vadd.f32 %v2291, %v2384
    %v2391 = vadd.f32 %v2293, %v2386
    %v2392 = vld [vmem:[#allocation3 + $0x4] sm:$0xf]
    %v2393 = vld [vmem:[#allocation3 + $0x8] sm:$0xf]
    %v2394 = vld [vmem:[#allocation3 + $0xc] sm:$0x1]
    %v2395 = vld [vmem:[#allocation3 + $0x14] sm:$0xf]
    %v2396 = vld [vmem:[#allocation3 + $0x18] sm:$0xf]
    %v2397 = vld [vmem:[#allocation3 + $0x1c] sm:$0x1]
    %v2399 = vshrl.u32 %v2392, 16
    %v2401 = vrot.slane %v2399, 4
    %v2402 = vshll.u32 %v2392, 16
    %v2404 = vrot.slane %v2402, 5
    %v2405 = vor.u32 %v2401, %v2404
    %v2406 = vrot.slane %v2405, 4
    %v2408 = vshll.u32 %v2393, 16
    %v2410 = vrot.slane %v2408, 5
    %v2411 = vsel %vm483, %v2406, %v2410
    %v2412 = vshrl.u32 %v2393, 16
    %v2414 = vrot.slane %v2412, 4
    %v2415 = vor.u32 %v2414, %v2410
    %v2416 = vrot.slane %v2415, 4
    %v2418 = vshll.u32 %v2394, 16
    %v2420 = vrot.slane %v2418, 5
    %v2421 = vsel %vm483, %v2416, %v2420
    %v2423 = vshrl.u32 %v2395, 16
    %v2425 = vrot.slane %v2423, 4
    %v2426 = vshll.u32 %v2395, 16
    %v2428 = vrot.slane %v2426, 5
    %v2429 = vor.u32 %v2425, %v2428
    %v2430 = vrot.slane %v2429, 4
    %v2432 = vshll.u32 %v2396, 16
    %v2434 = vrot.slane %v2432, 5
    %v2435 = vsel %vm483, %v2430, %v2434
    %v2436 = vshrl.u32 %v2396, 16
    %v2438 = vrot.slane %v2436, 4
    %v2439 = vor.u32 %v2438, %v2434
    %v2440 = vrot.slane %v2439, 4
    %v2442 = vshll.u32 %v2397, 16
    %v2444 = vrot.slane %v2442, 5
    %v2445 = vsel %vm483, %v2440, %v2444
    %v2446 = vld [vmem:[#allocation9 + $0xc0] sm:$0xf]
    %v2447 = vld [vmem:[#allocation9 + $0xc4] sm:$0xf]
    %v2448 = vld [vmem:[#allocation9 + $0xc8] sm:$0xf]
    %v2449 = vld [vmem:[#allocation9 + $0xcc] sm:$0xf]
    %v2450 = vld [vmem:[#allocation9 + $0xd0] sm:$0xf]
    %v2451 = vld [vmem:[#allocation9 + $0xd4] sm:$0xf]
    %v2452 = vld [vmem:[#allocation9 + $0xd8] sm:$0xf]
    %v2453 = vld [vmem:[#allocation9 + $0xdc] sm:$0xf]
    %v2454 = vld [vmem:[#allocation9 + $0xe0] sm:$0xf]
    %v2455 = vld [vmem:[#allocation9 + $0xe4] sm:$0xf]
    %v2456 = vld [vmem:[#allocation9 + $0xe8] sm:$0xf]
    %v2457 = vld [vmem:[#allocation9 + $0xec] sm:$0xf]
    %v2458 = vld [vmem:[#allocation9 + $0xf0] sm:$0xf]
    %v2459 = vld [vmem:[#allocation9 + $0xf4] sm:$0xf]
    %v2460 = vld [vmem:[#allocation9 + $0xf8] sm:$0xf]
    %v2461 = vld [vmem:[#allocation9 + $0xfc] sm:$0xf]
    %v2462 = vunpack.c.l.b16 %v2411
    %v2463 = vunpack.c.l.b16 %v2421
    %v2464 = vunpack.c.l.b16 %v2435
    %v2465 = vunpack.c.l.b16 %v2445
    %v2466 = vpack.c.b16 %v2463, %v2462
    %v2467 = vpack.c.b16 %v2465, %v2464
    %v2486 = vunpack.c.l.b16 %v2446
    %v2487 = vunpack.c.l.b16 %v2447
    %v2488 = vunpack.c.l.b16 %v2448
    %v2489 = vunpack.c.l.b16 %v2449
    %v2490 = vunpack.c.l.b16 %v2450
    %v2491 = vunpack.c.l.b16 %v2451
    %v2492 = vunpack.c.l.b16 %v2452
    %v2493 = vunpack.c.l.b16 %v2453
    %v2494 = vunpack.c.l.b16 %v2454
    %v2495 = vunpack.c.l.b16 %v2455
    %v2496 = vunpack.c.l.b16 %v2456
    %v2497 = vunpack.c.l.b16 %v2457
    %v2498 = vunpack.c.l.b16 %v2458
    %v2499 = vunpack.c.l.b16 %v2459
    %v2500 = vunpack.c.l.b16 %v2460
    %v2501 = vunpack.c.l.b16 %v2461
    %v2502 = vpack.c.b16 %v2487, %v2486
    %v2503 = vpack.c.b16 %v2489, %v2488
    %v2504 = vpack.c.b16 %v2491, %v2490
    %v2505 = vpack.c.b16 %v2493, %v2492
    %v2506 = vpack.c.b16 %v2495, %v2494
    %v2507 = vpack.c.b16 %v2497, %v2496
    %v2508 = vpack.c.b16 %v2499, %v2498
    %v2509 = vpack.c.b16 %v2501, %v2500
    %2518 = vmatpush.bf16.msra.mxu0 %v2509
    %2519 = vmatpush.bf16.msra.mxu0 %v2508
    %2520 = vmatpush.bf16.msra.mxu0 %v2507
    %2521 = vmatpush.bf16.msra.mxu0 %v2506
    %2522 = vmatpush.bf16.msra.mxu0 %v2505
    %2523 = vmatpush.bf16.msra.mxu0 %v2504
    %2524 = vmatpush.bf16.msra.mxu0 %v2503
    %2525 = vmatpush.bf16.msra.mxu0 %v2502
    %2526 = vmatmul.bf16.gmra.mxu0 %v2466
    %v2527 = vpop.f32.mrf.mxu0
    %v2528 = vadd.f32 0.0, %v2527
    %v2529 = vpop.f32.mrf.mxu0
    %v2530 = vadd.f32 0.0, %v2529
    %2531 = vmatmul.bf16.gmra.mxu0 %v2467
    %v2532 = vpop.f32.mrf.mxu0
    %v2533 = vadd.f32 0.0, %v2532
    %v2534 = vpop.f32.mrf.mxu0
    %v2535 = vadd.f32 0.0, %v2534
    %2536 = vdwg.mxu0
    %v2537 = vadd.f32 %v2388, %v2528
    %v2538 = vadd.f32 %v2389, %v2530
    %v2539 = vadd.f32 %v2390, %v2533
    %v2540 = vadd.f32 %v2391, %v2535
    %v2541 = vld [vmem:[#allocation3 + $0x4] sm:$0xe]
    %v2542 = vld [vmem:[#allocation3 + $0x14] sm:$0xe]
    %v2549 = vrot.slane %v2541, 5
    %v2550 = vrot.slane %v2549, 4
    %v2551 = vrot.slane %v2393, 5
    %v2552 = vsel %vm637, %v2550, %v2551
    %v2553 = vrot.slane %v2551, 4
    %v2554 = vrot.slane %v2394, 5
    %v2555 = vsel %vm637, %v2553, %v2554
    %v2556 = vrot.slane %v2542, 5
    %v2557 = vrot.slane %v2556, 4
    %v2558 = vrot.slane %v2396, 5
    %v2559 = vsel %vm637, %v2557, %v2558
    %v2560 = vrot.slane %v2558, 4
    %v2561 = vrot.slane %v2397, 5
    %v2562 = vsel %vm637, %v2560, %v2561
    %v2563 = vld [vmem:[#allocation9 + $0x100] sm:$0xf]
    %v2564 = vld [vmem:[#allocation9 + $0x104] sm:$0xf]
    %v2565 = vld [vmem:[#allocation9 + $0x108] sm:$0xf]
    %v2566 = vld [vmem:[#allocation9 + $0x10c] sm:$0xf]
    %v2567 = vld [vmem:[#allocation9 + $0x110] sm:$0xf]
    %v2568 = vld [vmem:[#allocation9 + $0x114] sm:$0xf]
    %v2569 = vld [vmem:[#allocation9 + $0x118] sm:$0xf]
    %v2570 = vld [vmem:[#allocation9 + $0x11c] sm:$0xf]
    %v2571 = vld [vmem:[#allocation9 + $0x120] sm:$0xf]
    %v2572 = vld [vmem:[#allocation9 + $0x124] sm:$0xf]
    %v2573 = vld [vmem:[#allocation9 + $0x128] sm:$0xf]
    %v2574 = vld [vmem:[#allocation9 + $0x12c] sm:$0xf]
    %v2575 = vld [vmem:[#allocation9 + $0x130] sm:$0xf]
    %v2576 = vld [vmem:[#allocation9 + $0x134] sm:$0xf]
    %v2577 = vld [vmem:[#allocation9 + $0x138] sm:$0xf]
    %v2578 = vld [vmem:[#allocation9 + $0x13c] sm:$0xf]
    %v2579 = vunpack.c.l.b16 %v2552
    %v2580 = vunpack.c.l.b16 %v2555
    %v2581 = vunpack.c.l.b16 %v2559
    %v2582 = vunpack.c.l.b16 %v2562
    %v2583 = vpack.c.b16 %v2580, %v2579
    %v2584 = vpack.c.b16 %v2582, %v2581
    %v2603 = vunpack.c.l.b16 %v2563
    %v2604 = vunpack.c.l.b16 %v2564
    %v2605 = vunpack.c.l.b16 %v2565
    %v2606 = vunpack.c.l.b16 %v2566
    %v2607 = vunpack.c.l.b16 %v2567
    %v2608 = vunpack.c.l.b16 %v2568
    %v2609 = vunpack.c.l.b16 %v2569
    %v2610 = vunpack.c.l.b16 %v2570
    %v2611 = vunpack.c.l.b16 %v2571
    %v2612 = vunpack.c.l.b16 %v2572
    %v2613 = vunpack.c.l.b16 %v2573
    %v2614 = vunpack.c.l.b16 %v2574
    %v2615 = vunpack.c.l.b16 %v2575
    %v2616 = vunpack.c.l.b16 %v2576
    %v2617 = vunpack.c.l.b16 %v2577
    %v2618 = vunpack.c.l.b16 %v2578
    %v2619 = vpack.c.b16 %v2604, %v2603
    %v2620 = vpack.c.b16 %v2606, %v2605
    %v2621 = vpack.c.b16 %v2608, %v2607
    %v2622 = vpack.c.b16 %v2610, %v2609
    %v2623 = vpack.c.b16 %v2612, %v2611
    %v2624 = vpack.c.b16 %v2614, %v2613
    %v2625 = vpack.c.b16 %v2616, %v2615
    %v2626 = vpack.c.b16 %v2618, %v2617
    %2635 = vmatpush.bf16.msra.mxu0 %v2626
    %2636 = vmatpush.bf16.msra.mxu0 %v2625
    %2637 = vmatpush.bf16.msra.mxu0 %v2624
    %2638 = vmatpush.bf16.msra.mxu0 %v2623
    %2639 = vmatpush.bf16.msra.mxu0 %v2622
    %2640 = vmatpush.bf16.msra.mxu0 %v2621
    %2641 = vmatpush.bf16.msra.mxu0 %v2620
    %2642 = vmatpush.bf16.msra.mxu0 %v2619
    %2643 = vmatmul.bf16.gmra.mxu0 %v2583
    %v2644 = vpop.f32.mrf.mxu0
    %v2645 = vadd.f32 0.0, %v2644
    %v2646 = vpop.f32.mrf.mxu0
    %v2647 = vadd.f32 0.0, %v2646
    %2648 = vmatmul.bf16.gmra.mxu0 %v2584
    %v2649 = vpop.f32.mrf.mxu0
    %v2650 = vadd.f32 0.0, %v2649
    %v2651 = vpop.f32.mrf.mxu0
    %v2652 = vadd.f32 0.0, %v2651
    %2653 = vdwg.mxu0
    %v2654 = vadd.f32 %v2537, %v2645
    %v2655 = vadd.f32 %v2538, %v2647
    %v2656 = vadd.f32 %v2539, %v2650
    %v2657 = vadd.f32 %v2540, %v2652
    %v2658 = vld [vmem:[%s8] sm:$0x1]
    %v2660 = vperm.slane %v2658, 0
    %v2662 = vadd.f32 %v2654, %v2660
    %v2663 = vadd.f32 %v2655, %v2660
    %v2664 = vadd.f32 %v2656, %v2660
    %v2665 = vadd.f32 %v2657, %v2660
    %v2666 = vmax.f32 %v2662, 0.0
    %v2667 = vmax.f32 %v2663, 0.0
    %v2668 = vmax.f32 %v2664, 0.0
    %v2669 = vmax.f32 %v2665, 0.0
    %v2670 = vpack.c.bf16 %v2666, %v2666
    %v2671 = vpack.c.bf16 %v2667, %v2667
    %v2672 = vpack.c.bf16 %v2668, %v2668
    %v2673 = vpack.c.bf16 %v2669, %v2669
    %2674 = vst [vmem:[#allocation2 + $0x4] sm:$0xf] %v2670
    %2675 = vst [vmem:[#allocation2 + $0x8] sm:$0xf] %v2671
    %2676 = vst [vmem:[#allocation2 + $0x14] sm:$0xf] %v2672
    %2677 = vst [vmem:[#allocation2 + $0x18] sm:$0xf] %v2673
    %v2678 = vld [vmem:[#allocation2 + $0x4] sm:$0xf]
    %v2679 = vld [vmem:[#allocation2 + $0x8] sm:$0xf]
    %v2680 = vld [vmem:[#allocation2 + $0x14] sm:$0xf]
    %v2681 = vld [vmem:[#allocation2 + $0x18] sm:$0xf]
    %v2682 = vld [vmem:[%s9] sm:$0xf]
    %v2683 = vld [vmem:[%s9 + $0x4] sm:$0xf]
    %v2684 = vld [vmem:[%s9 + $0x8] sm:$0xf]
    %v2685 = vld [vmem:[%s9 + $0xc] sm:$0xf]
    %v2686 = vld [vmem:[%s9 + $0x10] sm:$0xf]
    %v2687 = vld [vmem:[%s9 + $0x14] sm:$0xf]
    %v2688 = vld [vmem:[%s9 + $0x18] sm:$0xf]
    %v2689 = vld [vmem:[%s9 + $0x1c] sm:$0xf]
    %v2690 = vld [vmem:[%s9 + $0x20] sm:$0xf]
    %v2691 = vld [vmem:[%s9 + $0x24] sm:$0xf]
    %v2692 = vld [vmem:[%s9 + $0x28] sm:$0xf]
    %v2693 = vld [vmem:[%s9 + $0x2c] sm:$0xf]
    %v2694 = vld [vmem:[%s9 + $0x30] sm:$0xf]
    %v2695 = vld [vmem:[%s9 + $0x34] sm:$0xf]
    %v2696 = vld [vmem:[%s9 + $0x38] sm:$0xf]
    %v2697 = vld [vmem:[%s9 + $0x3c] sm:$0xf]
    %v2698 = vld [vmem:[%s10] sm:$0x1]
    %v2700 = vperm.slane %v2698, 0
    %v2706 = vunpack.c.l.b16 %v2678
    %v2707 = vunpack.c.l.b16 %v2679
    %v2708 = vunpack.c.l.b16 %v2680
    %v2709 = vunpack.c.l.b16 %v2681
    %v2710 = vpack.c.b16 %v2707, %v2706
    %v2711 = vpack.c.b16 %v2709, %v2708
    %v2730 = vunpack.c.l.b16 %v2682
    %v2731 = vunpack.c.l.b16 %v2683
    %v2732 = vunpack.c.l.b16 %v2684
    %v2733 = vunpack.c.l.b16 %v2685
    %v2734 = vunpack.c.l.b16 %v2686
    %v2735 = vunpack.c.l.b16 %v2687
    %v2736 = vunpack.c.l.b16 %v2688
    %v2737 = vunpack.c.l.b16 %v2689
    %v2738 = vunpack.c.l.b16 %v2690
    %v2739 = vunpack.c.l.b16 %v2691
    %v2740 = vunpack.c.l.b16 %v2692
    %v2741 = vunpack.c.l.b16 %v2693
    %v2742 = vunpack.c.l.b16 %v2694
    %v2743 = vunpack.c.l.b16 %v2695
    %v2744 = vunpack.c.l.b16 %v2696
    %v2745 = vunpack.c.l.b16 %v2697
    %v2746 = vpack.c.b16 %v2731, %v2730
    %v2747 = vpack.c.b16 %v2733, %v2732
    %v2748 = vpack.c.b16 %v2735, %v2734
    %v2749 = vpack.c.b16 %v2737, %v2736
    %v2750 = vpack.c.b16 %v2739, %v2738
    %v2751 = vpack.c.b16 %v2741, %v2740
    %v2752 = vpack.c.b16 %v2743, %v2742
    %v2753 = vpack.c.b16 %v2745, %v2744
    %2762 = vmatpush.bf16.msra.mxu0 %v2753
    %2763 = vmatpush.bf16.msra.mxu0 %v2752
    %2764 = vmatpush.bf16.msra.mxu0 %v2751
    %2765 = vmatpush.bf16.msra.mxu0 %v2750
    %2766 = vmatpush.bf16.msra.mxu0 %v2749
    %2767 = vmatpush.bf16.msra.mxu0 %v2748
    %2768 = vmatpush.bf16.msra.mxu0 %v2747
    %2769 = vmatpush.bf16.msra.mxu0 %v2746
    %2770 = vmatmul.bf16.gmra.mxu0 %v2710
    %v2771 = vpop.f32.mrf.mxu0
    %v2772 = vadd.f32 %v2700, %v2771
    %v2773 = vpop.f32.mrf.mxu0
    %v2774 = vadd.f32 %v2700, %v2773
    %2775 = vmatmul.bf16.gmra.mxu0 %v2711
    %v2776 = vpop.f32.mrf.mxu0
    %v2777 = vadd.f32 %v2700, %v2776
    %v2778 = vpop.f32.mrf.mxu0
    %v2779 = vadd.f32 %v2700, %v2778
    %2780 = vdwg.mxu0
    %2781 = vst [vmem:[%s11] sm:$0xff] %v2772
    %2782 = vst [vmem:[%s11 + $0x8] sm:$0xff] %v2774
    %2783 = vst [vmem:[%s11 + $0x10] sm:$0xff] %v2777
    %2784 = vst [vmem:[%s11 + $0x18] sm:$0xff] %v2779
    // Predicated region
    $region62: #{regression_fcn_forward.1} parent=1 // pred_check
      _
    $region63: #{regression_fcn_forward.1} parent=1 // pred_check_branch
      %2786 = sbr.rel (0) target = $region65
    $region64: #{regression_fcn_forward.1} parent=1 // pred_region
      _
    $region65: #{regression_fcn_forward.1} parent=1 // pred_fallthru
      _
    // Predicated region
    $region66: #{regression_fcn_forward.1} parent=1 // pred_check
      _
    $region67: #{regression_fcn_forward.1} parent=1 // pred_check_branch
      %2788 = sbr.rel (0) target = $region69
    $region68: #{regression_fcn_forward.1} parent=1 // pred_region
      _
    $region69: #{regression_fcn_forward.1} parent=1 // pred_fallthru
      _
    %2789 = vsyncpa [#allocation5], 1
    %2790 = vsyncpa [#allocation7], 1
    %2791 = vsyncpa [#allocation10], 1

</llo_original>
